<compile_context>
chip_gen: v5e
topology: v5e:2x2
jax: 0.10.0
libtpu: 0.0.40
codegen_flags: <defaults>
</compile_context>

<pallas_src>
import math

import jax
import jax.numpy as jnp
from jax.experimental import pallas as pl
from jax.experimental.pallas import tpu as pltpu

# ----------------------------- configuration -----------------------------
B, T = 2, 8          # batch, sequence length
E = 48               # embedding_size
H = 32               # hidden_size
NUM_LAYERS = 2
NUM_HEADS = 4
KD = 32              # total_key_depth
VD = 32              # total_value_depth
FILTER = 64          # filter_size (FFN middle width)
MAX_LEN = 100
EPS = 1e-6
QKV_COLS = 128       # fused Q|K|V weight zero-padded to a full 128-lane group

_BF16 = jnp.bfloat16


# ----------------------------- helpers (traced inside the kernel) --------
def _layer_norm(x, gamma, beta, eps=EPS):
    # Matches the reference LayerNorm: unbiased std, (std + eps) denominator.
    # Exact reciprocal (off the throughput-critical path; keeps bit-closeness).
    mean = jnp.mean(x, axis=-1, keepdims=True)
    d = x - mean
    var = jnp.sum(d * d, axis=-1, keepdims=True) * (1.0 / float(x.shape[-1] - 1))
    inv = 1.0 / (jnp.sqrt(var) + eps)
    return gamma * d * inv + beta


def _softmax(x):
    m = jnp.max(x, axis=-1, keepdims=True)
    e = jnp.exp(x - m)
    return e * pl.reciprocal(jnp.sum(e, axis=-1, keepdims=True), approx=True)


# ----------------------------- the Pallas kernel --------------------------
def encoder_kernel(x_ref, timing_ref, seq_row_ref, seq_col_ref,
                   lmask_ref, rmask_ref,
                   w_emb_ref, wqkv_ref, wo_ref,
                   c1w_ref, c1b_ref, c2w_ref, c2b_ref,
                   ln1g_ref, ln1b_ref, ln2g_ref, ln2b_ref,
                   lnfg_ref, lnfb_ref,
                   out_ref):
    n = B * T
    dk = KD // NUM_HEADS
    dv = VD // NUM_HEADS

    # embedding projection (no bias) + timing signal (broadcast in-kernel)
    h = jnp.dot(x_ref[...].astype(_BF16), w_emb_ref[...],
                preferred_element_type=jnp.float32)               # (n, H) f32
    h = h + jnp.concatenate([timing_ref[...]] * B, axis=0)

    # loop-invariant masks (hoisted; built from O(n) inputs, not O(n^2))
    amask = jnp.where(seq_row_ref[...] == seq_col_ref[...], 0.0, -1e9)   # (n, n)
    amask = jnp.broadcast_to(amask[None], (NUM_HEADS, n, n))
    lmask = lmask_ref[...]                                        # (n, 1): 0 at t == 0
    rmask = rmask_ref[...]                                        # (n, 1): 0 at t == T-1

    def tap_concat(z):
        # [x_{t-1} | x_t | x_{t+1}] with zeros at sequence borders
        # (ConstantPad1d((1,1)) + Conv1d(k=3) neighbourhood, no batch leakage).
        zl = pltpu.roll(z, shift=1, axis=0) * lmask
        zr = pltpu.roll(z, shift=n - 1, axis=0) * rmask
        return jnp.concatenate([zl, z, zr], axis=-1)

    for l in range(NUM_LAYERS):   # static unroll fine at NUM_LAYERS=2
        # -------- multi-head self-attention sub-layer --------
        xn = _layer_norm(h, ln1g_ref[l], ln1b_ref[l])

        # fused Q/K/V projection (scale already folded into the Q weight block)
        qkv = jnp.dot(xn.astype(_BF16), wqkv_ref[l],
                      preferred_element_type=jnp.float32)         # (n, 128) f32
        q = qkv[:, :KD]
        k = qkv[:, KD:2 * KD]
        v = qkv[:, 2 * KD:2 * KD + VD]

        # head-batched layout (NUM_HEADS, n, d) from lane slices + leading stack
        qh = jnp.stack([q[:, i * dk:(i + 1) * dk] for i in range(NUM_HEADS)],
                       axis=0).astype(_BF16)
        kh = jnp.stack([k[:, i * dk:(i + 1) * dk] for i in range(NUM_HEADS)],
                       axis=0).astype(_BF16)
        vh = jnp.stack([v[:, i * dv:(i + 1) * dv] for i in range(NUM_HEADS)],
                       axis=0).astype(_BF16)

        logits = jnp.einsum('hqd,hkd->hqk', qh, kh,
                            preferred_element_type=jnp.float32)   # (NH, n, n)
        logits = logits + amask                   # kill cross-sequence attention
        w_att = _softmax(logits).astype(_BF16)
        ctx = jnp.einsum('hqk,hkd->hqd', w_att, vh,
                         preferred_element_type=jnp.float32)      # (NH, n, dv)
        ctx_cat = jnp.concatenate([ctx[i] for i in range(NUM_HEADS)], axis=-1)
        y = jnp.dot(ctx_cat.astype(_BF16), wo_ref[l],
                    preferred_element_type=jnp.float32)
        h = h + y                                 # residual (layer dropout = identity)

        # -------- position-wise feed-forward ('cc', padding='both') --------
        xn = _layer_norm(h, ln2g_ref[l], ln2b_ref[l])
        f = jnp.dot(tap_concat(xn).astype(_BF16), c1w_ref[l],
                    preferred_element_type=jnp.float32) + c1b_ref[l]
        f = jnp.maximum(f, 0.0)
        f = jnp.dot(tap_concat(f).astype(_BF16), c2w_ref[l],
                    preferred_element_type=jnp.float32) + c2b_ref[l]
        # Reference PositionwiseFeedForward applies ReLU after every layer
        # (including the last conv) due to its `i < len(self.layers)` check.
        f = jnp.maximum(f, 0.0)
        h = h + f                                 # residual

    out_ref[...] = _layer_norm(h, lnfg_ref[...], lnfb_ref[...])


# ----------------------------- wrapper -------------------------------------
def encoder_forward(x, params):
    (timing, w_emb, wqkv, wo, c1w, c1b, c2w, c2b,
     ln1g, ln1b, ln2g, ln2b, lnfg, lnfb) = params
    Bx, Tx, Ex = x.shape
    n = Bx * Tx

    xf = x.reshape(n, Ex)                                   # flatten batch into sublanes

    # tiny O(n) mask inputs (replace the old O(n^2) shift matrices)
    bid = jnp.repeat(jnp.arange(Bx, dtype=jnp.float32), Tx)
    seq_row = bid[:, None]                                  # (n, 1) sequence id per row
    seq_col = bid[None, :]                                  # (1, n)
    pos = jnp.arange(n, dtype=jnp.int32) % Tx
    lmask = (pos != 0).astype(jnp.float32)[:, None]         # 0 at sequence starts
    rmask = (pos != Tx - 1).astype(jnp.float32)[:, None]    # 0 at sequence ends

    args = (xf, timing, seq_row, seq_col, lmask, rmask,
            w_emb, wqkv, wo, c1w, c1b, c2w, c2b,
            ln1g, ln1b, ln2g, ln2b, lnfg, lnfb)

    vmem = pltpu.MemorySpace.VMEM
    out = pl.pallas_call(
        encoder_kernel,
        out_shape=jax.ShapeDtypeStruct((n, H), jnp.float32),
        in_specs=[pl.BlockSpec(memory_space=vmem) for _ in args],
        out_specs=pl.BlockSpec(memory_space=vmem),
    )(*args)
    return out.reshape(Bx, Tx, H)


# ----------------------------- parameter / signal setup --------------------
def gen_timing_signal(length, channels, min_timescale=1.0, max_timescale=1.0e4):
    position = jnp.arange(length, dtype=jnp.float32)
    num_timescales = channels // 2
    log_timescale_increment = (math.log(float(max_timescale) / float(min_timescale))
                               / max(float(num_timescales) - 1.0, 1.0))
    inv_timescales = min_timescale * jnp.exp(
        jnp.arange(num_timescales, dtype=jnp.float32) * -log_timescale_increment)
    scaled_time = position[:, None] * inv_timescales[None, :]
    signal = jnp.concatenate([jnp.sin(scaled_time), jnp.cos(scaled_time)], axis=1)
    if channels % 2:
        signal = jnp.pad(signal, ((0, 0), (0, channels % 2)))
    return signal  # (length, channels)


def init_params(key):
    ks = jax.random.split(key, 9)

    def rnd(k, shape, scale=0.05):
        return jax.random.normal(k, shape, dtype=jnp.float32) * scale

    timing = gen_timing_signal(MAX_LEN, H)[:T, :]             # (T, H)
    w_emb = rnd(ks[0], (E, H))                                # Linear(E->H, bias=False)

    dk = KD // NUM_HEADS
    wq = rnd(ks[1], (NUM_LAYERS, H, KD)) * (float(dk) ** -0.5)  # scale folded into Q
    wk = rnd(ks[2], (NUM_LAYERS, H, KD))
    wv = rnd(ks[3], (NUM_LAYERS, H, VD))
    pad = jnp.zeros((NUM_LAYERS, H, QKV_COLS - (2 * KD + VD)), jnp.float32)
    wqkv = jnp.concatenate([wq, wk, wv, pad], axis=-1)        # (L, H, 128) lane-dense

    wo = rnd(ks[4], (NUM_LAYERS, VD, H))

    # Conv1d(k=3) taps pre-stacked into one (3*Cin, Cout) matrix per conv:
    #   rows [0:Cin]      -> tap applied to x[t-1]
    #   rows [Cin:2*Cin]  -> tap applied to x[t]
    #   rows [2*Cin:]     -> tap applied to x[t+1]
    c1w = rnd(ks[5], (NUM_LAYERS, 3 * H, FILTER))
    c1b = rnd(ks[6], (NUM_LAYERS, 1, FILTER))
    c2w = rnd(ks[7], (NUM_LAYERS, 3 * FILTER, H))
    c2b = rnd(ks[8], (NUM_LAYERS, 1, H))

    ln1g = jnp.ones((NUM_LAYERS, 1, H), jnp.float32)
    ln1b = jnp.zeros((NUM_LAYERS, 1, H), jnp.float32)
    ln2g = jnp.ones((NUM_LAYERS, 1, H), jnp.float32)
    ln2b = jnp.zeros((NUM_LAYERS, 1, H), jnp.float32)
    lnfg = jnp.ones((1, H), jnp.float32)
    lnfb = jnp.zeros((1, H), jnp.float32)

    # weights in bf16 (native MXU path), biases / LN params / timing in f32
    return (timing, w_emb.astype(_BF16), wqkv.astype(_BF16), wo.astype(_BF16),
            c1w.astype(_BF16), c1b, c2w.astype(_BF16), c2b,
            ln1g, ln1b, ln2g, ln2b, lnfg, lnfb)


if __name__ == "__main__":
    key = jax.random.PRNGKey(0)
    k_x, k_p = jax.random.split(key)
    x = jax.random.normal(k_x, (B, T, E), dtype=jnp.float32)
    params = init_params(k_p)

    out = encoder_forward(x, params)
    out = jax.block_until_ready(out)

    assert out.shape == (B, T, H), out.shape
    assert bool(jnp.all(jnp.isfinite(out)))
    print("KERNEL_OK")
</pallas_src>

<mosaic_0001>
module attributes {stable_mosaic.version = 11 : i64} {
  func.func @encoder_kernel(%arg0: memref<16x48xf32, #tpu.memory_space<vmem>>, %arg1: memref<8x32xf32, #tpu.memory_space<vmem>>, %arg2: memref<16x1xf32, #tpu.memory_space<vmem>>, %arg3: memref<1x16xf32, #tpu.memory_space<vmem>>, %arg4: memref<16x1xf32, #tpu.memory_space<vmem>>, %arg5: memref<16x1xf32, #tpu.memory_space<vmem>>, %arg6: memref<48x32xbf16, #tpu.memory_space<vmem>>, %arg7: memref<2x32x128xbf16, #tpu.memory_space<vmem>>, %arg8: memref<2x32x32xbf16, #tpu.memory_space<vmem>>, %arg9: memref<2x96x64xbf16, #tpu.memory_space<vmem>>, %arg10: memref<2x1x64xf32, #tpu.memory_space<vmem>>, %arg11: memref<2x192x32xbf16, #tpu.memory_space<vmem>>, %arg12: memref<2x1x32xf32, #tpu.memory_space<vmem>>, %arg13: memref<2x1x32xf32, #tpu.memory_space<vmem>>, %arg14: memref<2x1x32xf32, #tpu.memory_space<vmem>>, %arg15: memref<2x1x32xf32, #tpu.memory_space<vmem>>, %arg16: memref<2x1x32xf32, #tpu.memory_space<vmem>>, %arg17: memref<1x32xf32, #tpu.memory_space<vmem>>, %arg18: memref<1x32xf32, #tpu.memory_space<vmem>>, %arg19: memref<16x32xf32, #tpu.memory_space<vmem>>) attributes {dimension_semantics = [], scalar_prefetch = 0 : i64, scratch_operands = 0 : i64, tpu.core_type = #tpu.core_type<tc>} {
    %c0 = arith.constant 0 : index
    %c0_0 = arith.constant 0 : index
    %0 = vector.load %arg0[%c0, %c0_0] : memref<16x48xf32, #tpu.memory_space<vmem>>, vector<16x48xf32>
    %1 = arith.truncf %0 : vector<16x48xf32> to vector<16x48xbf16>
    %c0_1 = arith.constant 0 : index
    %c0_2 = arith.constant 0 : index
    %2 = vector.load %arg6[%c0_1, %c0_2] : memref<48x32xbf16, #tpu.memory_space<vmem>>, vector<48x32xbf16>
    %cst = arith.constant dense<0.000000e+00> : vector<16x32xf32>
    %3 = tpu.matmul %1, %2, %cst {dimension_numbers = #tpu.dot_dimension_numbers<[1], [0], [0], [1], [0, 0, 1, 1], [], []>} : vector<16x48xbf16>, vector<48x32xbf16>, vector<16x32xf32> -> vector<16x32xf32>
    %c0_3 = arith.constant 0 : index
    %c0_4 = arith.constant 0 : index
    %4 = vector.load %arg1[%c0_3, %c0_4] : memref<8x32xf32, #tpu.memory_space<vmem>>, vector<8x32xf32>
    %5 = tpu.concatenate %4, %4 in 0 : vector<8x32xf32>, vector<8x32xf32> -> vector<16x32xf32>
    %6 = arith.addf %3, %5 : vector<16x32xf32>
    %c0_5 = arith.constant 0 : index
    %c0_6 = arith.constant 0 : index
    %7 = vector.load %arg2[%c0_5, %c0_6] : memref<16x1xf32, #tpu.memory_space<vmem>>, vector<16x1xf32>
    %c0_7 = arith.constant 0 : index
    %c0_8 = arith.constant 0 : index
    %8 = vector.load %arg3[%c0_7, %c0_8] : memref<1x16xf32, #tpu.memory_space<vmem>>, vector<1x16xf32>
    %9 = vector.broadcast %7 : vector<16x1xf32> to vector<16x16xf32>
    %10 = vector.broadcast %8 : vector<1x16xf32> to vector<16x16xf32>
    %11 = arith.cmpf oeq, %9, %10 : vector<16x16xf32>
    %cst_9 = arith.constant 0.000000e+00 : f32
    %cst_10 = arith.constant -1.000000e+09 : f32
    %12 = vector.broadcast %cst_9 : f32 to vector<16x16xf32>
    %13 = vector.broadcast %cst_10 : f32 to vector<16x16xf32>
    %14 = arith.select %11, %12, %13 : vector<16x16xi1>, vector<16x16xf32>
    %15 = vector.shape_cast %14 : vector<16x16xf32> to vector<1x16x16xf32>
    %16 = vector.shape_cast %15 : vector<1x16x16xf32> to vector<1x16x16xf32>
    %17 = vector.broadcast %16 : vector<1x16x16xf32> to vector<4x16x16xf32>
    %c0_11 = arith.constant 0 : index
    %c0_12 = arith.constant 0 : index
    %18 = vector.load %arg4[%c0_11, %c0_12] : memref<16x1xf32, #tpu.memory_space<vmem>>, vector<16x1xf32>
    %c0_13 = arith.constant 0 : index
    %c0_14 = arith.constant 0 : index
    %19 = vector.load %arg5[%c0_13, %c0_14] : memref<16x1xf32, #tpu.memory_space<vmem>>, vector<16x1xf32>
    %c0_15 = arith.constant 0 : index
    %c0_16 = arith.constant 0 : index
    %c0_17 = arith.constant 0 : index
    %20 = vector.load %arg13[%c0_15, %c0_16, %c0_17] : memref<2x1x32xf32, #tpu.memory_space<vmem>>, vector<1x1x32xf32>
    %21 = vector.shape_cast %20 : vector<1x1x32xf32> to vector<1x32xf32>
    %c0_18 = arith.constant 0 : index
    %c0_19 = arith.constant 0 : index
    %c0_20 = arith.constant 0 : index
    %22 = vector.load %arg14[%c0_18, %c0_19, %c0_20] : memref<2x1x32xf32, #tpu.memory_space<vmem>>, vector<1x1x32xf32>
    %23 = vector.shape_cast %22 : vector<1x1x32xf32> to vector<1x32xf32>
    %cst_21 = arith.constant dense<0.000000e+00> : vector<16xf32>
    %24 = vector.multi_reduction <add>, %6, %cst_21 [1] : vector<16x32xf32> to vector<16xf32>
    %25 = vector.shape_cast %24 : vector<16xf32> to vector<16x1xf32>
    %cst_22 = arith.constant 3.200000e+01 : f32
    %26 = vector.broadcast %cst_22 : f32 to vector<16x1xf32>
    %27 = arith.divf %25, %26 : vector<16x1xf32>
    %28 = vector.broadcast %27 : vector<16x1xf32> to vector<16x32xf32>
    %29 = arith.subf %6, %28 : vector<16x32xf32>
    %30 = arith.mulf %29, %29 : vector<16x32xf32>
    %cst_23 = arith.constant dense<0.000000e+00> : vector<16xf32>
    %31 = vector.multi_reduction <add>, %30, %cst_23 [1] : vector<16x32xf32> to vector<16xf32>
    %32 = vector.shape_cast %31 : vector<16xf32> to vector<16x1xf32>
    %cst_24 = arith.constant 0.0322580636 : f32
    %33 = vector.broadcast %cst_24 : f32 to vector<16x1xf32>
    %34 = arith.mulf %32, %33 : vector<16x1xf32>
    %35 = math.sqrt %34 : vector<16x1xf32>
    %cst_25 = arith.constant 9.99999997E-7 : f32
    %36 = vector.broadcast %cst_25 : f32 to vector<16x1xf32>
    %37 = arith.addf %35, %36 : vector<16x1xf32>
    %cst_26 = arith.constant 1.000000e+00 : f32
    %38 = vector.broadcast %cst_26 : f32 to vector<16x1xf32>
    %39 = arith.divf %38, %37 : vector<16x1xf32>
    %40 = vector.broadcast %21 : vector<1x32xf32> to vector<16x32xf32>
    %41 = arith.mulf %40, %29 : vector<16x32xf32>
    %42 = vector.broadcast %39 : vector<16x1xf32> to vector<16x32xf32>
    %43 = arith.mulf %41, %42 : vector<16x32xf32>
    %44 = vector.broadcast %23 : vector<1x32xf32> to vector<16x32xf32>
    %45 = arith.addf %43, %44 : vector<16x32xf32>
    %46 = arith.truncf %45 : vector<16x32xf32> to vector<16x32xbf16>
    %c0_27 = arith.constant 0 : index
    %c0_28 = arith.constant 0 : index
    %c0_29 = arith.constant 0 : index
    %47 = vector.load %arg7[%c0_27, %c0_28, %c0_29] : memref<2x32x128xbf16, #tpu.memory_space<vmem>>, vector<1x32x128xbf16>
    %48 = vector.shape_cast %47 : vector<1x32x128xbf16> to vector<32x128xbf16>
    %cst_30 = arith.constant dense<0.000000e+00> : vector<16x128xf32>
    %49 = tpu.matmul %46, %48, %cst_30 {dimension_numbers = #tpu.dot_dimension_numbers<[1], [0], [0], [1], [0, 0, 1, 1], [], []>} : vector<16x32xbf16>, vector<32x128xbf16>, vector<16x128xf32> -> vector<16x128xf32>
    %50 = vector.extract_strided_slice %49 {offsets = [0, 0], sizes = [16, 32], strides = [1, 1]} : vector<16x128xf32> to vector<16x32xf32>
    %51 = vector.extract_strided_slice %49 {offsets = [0, 32], sizes = [16, 32], strides = [1, 1]} : vector<16x128xf32> to vector<16x32xf32>
    %52 = vector.extract_strided_slice %49 {offsets = [0, 64], sizes = [16, 32], strides = [1, 1]} : vector<16x128xf32> to vector<16x32xf32>
    %53 = vector.extract_strided_slice %50 {offsets = [0, 0], sizes = [16, 8], strides = [1, 1]} : vector<16x32xf32> to vector<16x8xf32>
    %54 = vector.extract_strided_slice %50 {offsets = [0, 8], sizes = [16, 8], strides = [1, 1]} : vector<16x32xf32> to vector<16x8xf32>
    %55 = vector.extract_strided_slice %50 {offsets = [0, 16], sizes = [16, 8], strides = [1, 1]} : vector<16x32xf32> to vector<16x8xf32>
    %56 = vector.extract_strided_slice %50 {offsets = [0, 24], sizes = [16, 8], strides = [1, 1]} : vector<16x32xf32> to vector<16x8xf32>
    %57 = vector.shape_cast %53 : vector<16x8xf32> to vector<1x16x8xf32>
    %58 = vector.shape_cast %54 : vector<16x8xf32> to vector<1x16x8xf32>
    %59 = vector.shape_cast %55 : vector<16x8xf32> to vector<1x16x8xf32>
    %60 = vector.shape_cast %56 : vector<16x8xf32> to vector<1x16x8xf32>
    %61 = tpu.concatenate %57, %58, %59, %60 in 0 : vector<1x16x8xf32>, vector<1x16x8xf32>, vector<1x16x8xf32>, vector<1x16x8xf32> -> vector<4x16x8xf32>
    %62 = arith.truncf %61 : vector<4x16x8xf32> to vector<4x16x8xbf16>
    %63 = vector.extract_strided_slice %51 {offsets = [0, 0], sizes = [16, 8], strides = [1, 1]} : vector<16x32xf32> to vector<16x8xf32>
    %64 = vector.extract_strided_slice %51 {offsets = [0, 8], sizes = [16, 8], strides = [1, 1]} : vector<16x32xf32> to vector<16x8xf32>
    %65 = vector.extract_strided_slice %51 {offsets = [0, 16], sizes = [16, 8], strides = [1, 1]} : vector<16x32xf32> to vector<16x8xf32>
    %66 = vector.extract_strided_slice %51 {offsets = [0, 24], sizes = [16, 8], strides = [1, 1]} : vector<16x32xf32> to vector<16x8xf32>
    %67 = vector.shape_cast %63 : vector<16x8xf32> to vector<1x16x8xf32>
    %68 = vector.shape_cast %64 : vector<16x8xf32> to vector<1x16x8xf32>
    %69 = vector.shape_cast %65 : vector<16x8xf32> to vector<1x16x8xf32>
    %70 = vector.shape_cast %66 : vector<16x8xf32> to vector<1x16x8xf32>
    %71 = tpu.concatenate %67, %68, %69, %70 in 0 : vector<1x16x8xf32>, vector<1x16x8xf32>, vector<1x16x8xf32>, vector<1x16x8xf32> -> vector<4x16x8xf32>
    %72 = arith.truncf %71 : vector<4x16x8xf32> to vector<4x16x8xbf16>
    %73 = vector.extract_strided_slice %52 {offsets = [0, 0], sizes = [16, 8], strides = [1, 1]} : vector<16x32xf32> to vector<16x8xf32>
    %74 = vector.extract_strided_slice %52 {offsets = [0, 8], sizes = [16, 8], strides = [1, 1]} : vector<16x32xf32> to vector<16x8xf32>
    %75 = vector.extract_strided_slice %52 {offsets = [0, 16], sizes = [16, 8], strides = [1, 1]} : vector<16x32xf32> to vector<16x8xf32>
    %76 = vector.extract_strided_slice %52 {offsets = [0, 24], sizes = [16, 8], strides = [1, 1]} : vector<16x32xf32> to vector<16x8xf32>
    %77 = vector.shape_cast %73 : vector<16x8xf32> to vector<1x16x8xf32>
    %78 = vector.shape_cast %74 : vector<16x8xf32> to vector<1x16x8xf32>
    %79 = vector.shape_cast %75 : vector<16x8xf32> to vector<1x16x8xf32>
    %80 = vector.shape_cast %76 : vector<16x8xf32> to vector<1x16x8xf32>
    %81 = tpu.concatenate %77, %78, %79, %80 in 0 : vector<1x16x8xf32>, vector<1x16x8xf32>, vector<1x16x8xf32>, vector<1x16x8xf32> -> vector<4x16x8xf32>
    %82 = arith.truncf %81 : vector<4x16x8xf32> to vector<4x16x8xbf16>
    "tpu.trace_start"() <{level = 10 : i32, message = "hqd,hkd->hqk"}> : () -> ()
    %cst_31 = arith.constant dense<0.000000e+00> : vector<4x16x16xf32>
    %83 = tpu.matmul %62, %72, %cst_31 {dimension_numbers = #tpu.dot_dimension_numbers<[2], [2], [1], [1], [0, 0, 0, 1, 1, 1], [0], [0]>} : vector<4x16x8xbf16>, vector<4x16x8xbf16>, vector<4x16x16xf32> -> vector<4x16x16xf32>
    "tpu.trace_stop"() : () -> ()
    %84 = arith.addf %83, %17 : vector<4x16x16xf32>
    %cst_32 = arith.constant dense<0xFF800000> : vector<4x16xf32>
    %85 = vector.multi_reduction <maximumf>, %84, %cst_32 [2] : vector<4x16x16xf32> to vector<4x16xf32>
    %86 = vector.shape_cast %85 : vector<4x16xf32> to vector<4x16x1xf32>
    %87 = vector.broadcast %86 : vector<4x16x1xf32> to vector<4x16x16xf32>
    %88 = arith.subf %84, %87 : vector<4x16x16xf32>
    %89 = math.exp %88 : vector<4x16x16xf32>
    %cst_33 = arith.constant dense<0.000000e+00> : vector<4x16xf32>
    %90 = vector.multi_reduction <add>, %89, %cst_33 [2] : vector<4x16x16xf32> to vector<4x16xf32>
    %91 = vector.shape_cast %90 : vector<4x16xf32> to vector<4x16x1xf32>
    %92 = tpu.reciprocal %91 {approx = true} : vector<4x16x1xf32> -> vector<4x16x1xf32>
    %93 = vector.broadcast %92 : vector<4x16x1xf32> to vector<4x16x16xf32>
    %94 = arith.mulf %89, %93 : vector<4x16x16xf32>
    %95 = arith.truncf %94 : vector<4x16x16xf32> to vector<4x16x16xbf16>
    "tpu.trace_start"() <{level = 10 : i32, message = "hqk,hkd->hqd"}> : () -> ()
    %cst_34 = arith.constant dense<0.000000e+00> : vector<4x16x8xf32>
    %96 = tpu.matmul %95, %82, %cst_34 {dimension_numbers = #tpu.dot_dimension_numbers<[2], [1], [1], [2], [0, 0, 0, 1, 1, 2], [0], [0]>} : vector<4x16x16xbf16>, vector<4x16x8xbf16>, vector<4x16x8xf32> -> vector<4x16x8xf32>
    "tpu.trace_stop"() : () -> ()
    %97 = vector.extract_strided_slice %96 {offsets = [0, 0, 0], sizes = [1, 16, 8], strides = [1, 1, 1]} : vector<4x16x8xf32> to vector<1x16x8xf32>
    %98 = vector.shape_cast %97 : vector<1x16x8xf32> to vector<16x8xf32>
    %99 = vector.extract_strided_slice %96 {offsets = [1, 0, 0], sizes = [1, 16, 8], strides = [1, 1, 1]} : vector<4x16x8xf32> to vector<1x16x8xf32>
    %100 = vector.shape_cast %99 : vector<1x16x8xf32> to vector<16x8xf32>
    %101 = vector.extract_strided_slice %96 {offsets = [2, 0, 0], sizes = [1, 16, 8], strides = [1, 1, 1]} : vector<4x16x8xf32> to vector<1x16x8xf32>
    %102 = vector.shape_cast %101 : vector<1x16x8xf32> to vector<16x8xf32>
    %103 = vector.extract_strided_slice %96 {offsets = [3, 0, 0], sizes = [1, 16, 8], strides = [1, 1, 1]} : vector<4x16x8xf32> to vector<1x16x8xf32>
    %104 = vector.shape_cast %103 : vector<1x16x8xf32> to vector<16x8xf32>
    %105 = tpu.concatenate %98, %100, %102, %104 in 1 : vector<16x8xf32>, vector<16x8xf32>, vector<16x8xf32>, vector<16x8xf32> -> vector<16x32xf32>
    %106 = arith.truncf %105 : vector<16x32xf32> to vector<16x32xbf16>
    %c0_35 = arith.constant 0 : index
    %c0_36 = arith.constant 0 : index
    %c0_37 = arith.constant 0 : index
    %107 = vector.load %arg8[%c0_35, %c0_36, %c0_37] : memref<2x32x32xbf16, #tpu.memory_space<vmem>>, vector<1x32x32xbf16>
    %108 = vector.shape_cast %107 : vector<1x32x32xbf16> to vector<32x32xbf16>
    %cst_38 = arith.constant dense<0.000000e+00> : vector<16x32xf32>
    %109 = tpu.matmul %106, %108, %cst_38 {dimension_numbers = #tpu.dot_dimension_numbers<[1], [0], [0], [1], [0, 0, 1, 1], [], []>} : vector<16x32xbf16>, vector<32x32xbf16>, vector<16x32xf32> -> vector<16x32xf32>
    %110 = arith.addf %6, %109 : vector<16x32xf32>
    %c0_39 = arith.constant 0 : index
    %c0_40 = arith.constant 0 : index
    %c0_41 = arith.constant 0 : index
    %111 = vector.load %arg15[%c0_39, %c0_40, %c0_41] : memref<2x1x32xf32, #tpu.memory_space<vmem>>, vector<1x1x32xf32>
    %112 = vector.shape_cast %111 : vector<1x1x32xf32> to vector<1x32xf32>
    %c0_42 = arith.constant 0 : index
    %c0_43 = arith.constant 0 : index
    %c0_44 = arith.constant 0 : index
    %113 = vector.load %arg16[%c0_42, %c0_43, %c0_44] : memref<2x1x32xf32, #tpu.memory_space<vmem>>, vector<1x1x32xf32>
    %114 = vector.shape_cast %113 : vector<1x1x32xf32> to vector<1x32xf32>
    %cst_45 = arith.constant dense<0.000000e+00> : vector<16xf32>
    %115 = vector.multi_reduction <add>, %110, %cst_45 [1] : vector<16x32xf32> to vector<16xf32>
    %116 = vector.shape_cast %115 : vector<16xf32> to vector<16x1xf32>
    %cst_46 = arith.constant 3.200000e+01 : f32
    %117 = vector.broadcast %cst_46 : f32 to vector<16x1xf32>
    %118 = arith.divf %116, %117 : vector<16x1xf32>
    %119 = vector.broadcast %118 : vector<16x1xf32> to vector<16x32xf32>
    %120 = arith.subf %110, %119 : vector<16x32xf32>
    %121 = arith.mulf %120, %120 : vector<16x32xf32>
    %cst_47 = arith.constant dense<0.000000e+00> : vector<16xf32>
    %122 = vector.multi_reduction <add>, %121, %cst_47 [1] : vector<16x32xf32> to vector<16xf32>
    %123 = vector.shape_cast %122 : vector<16xf32> to vector<16x1xf32>
    %cst_48 = arith.constant 0.0322580636 : f32
    %124 = vector.broadcast %cst_48 : f32 to vector<16x1xf32>
    %125 = arith.mulf %123, %124 : vector<16x1xf32>
    %126 = math.sqrt %125 : vector<16x1xf32>
    %cst_49 = arith.constant 9.99999997E-7 : f32
    %127 = vector.broadcast %cst_49 : f32 to vector<16x1xf32>
    %128 = arith.addf %126, %127 : vector<16x1xf32>
    %cst_50 = arith.constant 1.000000e+00 : f32
    %129 = vector.broadcast %cst_50 : f32 to vector<16x1xf32>
    %130 = arith.divf %129, %128 : vector<16x1xf32>
    %131 = vector.broadcast %112 : vector<1x32xf32> to vector<16x32xf32>
    %132 = arith.mulf %131, %120 : vector<16x32xf32>
    %133 = vector.broadcast %130 : vector<16x1xf32> to vector<16x32xf32>
    %134 = arith.mulf %132, %133 : vector<16x32xf32>
    %135 = vector.broadcast %114 : vector<1x32xf32> to vector<16x32xf32>
    %136 = arith.addf %134, %135 : vector<16x32xf32>
    %c1_i32 = arith.constant 1 : i32
    %137 = tpu.dynamic_rotate %136 by %c1_i32 dim 0 : vector<16x32xf32>, i32 -> vector<16x32xf32>
    %138 = vector.broadcast %18 : vector<16x1xf32> to vector<16x32xf32>
    %139 = arith.mulf %137, %138 : vector<16x32xf32>
    %c15_i32 = arith.constant 15 : i32
    %140 = tpu.dynamic_rotate %136 by %c15_i32 dim 0 : vector<16x32xf32>, i32 -> vector<16x32xf32>
    %141 = vector.broadcast %19 : vector<16x1xf32> to vector<16x32xf32>
    %142 = arith.mulf %140, %141 : vector<16x32xf32>
    %143 = tpu.concatenate %139, %136, %142 in 1 : vector<16x32xf32>, vector<16x32xf32>, vector<16x32xf32> -> vector<16x96xf32>
    %144 = arith.truncf %143 : vector<16x96xf32> to vector<16x96xbf16>
    %c0_51 = arith.constant 0 : index
    %c0_52 = arith.constant 0 : index
    %c0_53 = arith.constant 0 : index
    %145 = vector.load %arg9[%c0_51, %c0_52, %c0_53] : memref<2x96x64xbf16, #tpu.memory_space<vmem>>, vector<1x96x64xbf16>
    %146 = vector.shape_cast %145 : vector<1x96x64xbf16> to vector<96x64xbf16>
    %cst_54 = arith.constant dense<0.000000e+00> : vector<16x64xf32>
    %147 = tpu.matmul %144, %146, %cst_54 {dimension_numbers = #tpu.dot_dimension_numbers<[1], [0], [0], [1], [0, 0, 1, 1], [], []>} : vector<16x96xbf16>, vector<96x64xbf16>, vector<16x64xf32> -> vector<16x64xf32>
    %c0_55 = arith.constant 0 : index
    %c0_56 = arith.constant 0 : index
    %c0_57 = arith.constant 0 : index
    %148 = vector.load %arg10[%c0_55, %c0_56, %c0_57] : memref<2x1x64xf32, #tpu.memory_space<vmem>>, vector<1x1x64xf32>
    %149 = vector.shape_cast %148 : vector<1x1x64xf32> to vector<1x64xf32>
    %150 = vector.broadcast %149 : vector<1x64xf32> to vector<16x64xf32>
    %151 = arith.addf %147, %150 : vector<16x64xf32>
    %cst_58 = arith.constant 0.000000e+00 : f32
    %152 = vector.broadcast %cst_58 : f32 to vector<16x64xf32>
    %153 = arith.maximumf %151, %152 : vector<16x64xf32>
    %c1_i32_59 = arith.constant 1 : i32
    %154 = tpu.dynamic_rotate %153 by %c1_i32_59 dim 0 : vector<16x64xf32>, i32 -> vector<16x64xf32>
    %155 = vector.broadcast %18 : vector<16x1xf32> to vector<16x64xf32>
    %156 = arith.mulf %154, %155 : vector<16x64xf32>
    %c15_i32_60 = arith.constant 15 : i32
    %157 = tpu.dynamic_rotate %153 by %c15_i32_60 dim 0 : vector<16x64xf32>, i32 -> vector<16x64xf32>
    %158 = vector.broadcast %19 : vector<16x1xf32> to vector<16x64xf32>
    %159 = arith.mulf %157, %158 : vector<16x64xf32>
    %160 = tpu.concatenate %156, %153, %159 in 1 : vector<16x64xf32>, vector<16x64xf32>, vector<16x64xf32> -> vector<16x192xf32>
    %161 = arith.truncf %160 : vector<16x192xf32> to vector<16x192xbf16>
    %c0_61 = arith.constant 0 : index
    %c0_62 = arith.constant 0 : index
    %c0_63 = arith.constant 0 : index
    %162 = vector.load %arg11[%c0_61, %c0_62, %c0_63] : memref<2x192x32xbf16, #tpu.memory_space<vmem>>, vector<1x192x32xbf16>
    %163 = vector.shape_cast %162 : vector<1x192x32xbf16> to vector<192x32xbf16>
    %cst_64 = arith.constant dense<0.000000e+00> : vector<16x32xf32>
    %164 = tpu.matmul %161, %163, %cst_64 {dimension_numbers = #tpu.dot_dimension_numbers<[1], [0], [0], [1], [0, 0, 1, 1], [], []>} : vector<16x192xbf16>, vector<192x32xbf16>, vector<16x32xf32> -> vector<16x32xf32>
    %c0_65 = arith.constant 0 : index
    %c0_66 = arith.constant 0 : index
    %c0_67 = arith.constant 0 : index
    %165 = vector.load %arg12[%c0_65, %c0_66, %c0_67] : memref<2x1x32xf32, #tpu.memory_space<vmem>>, vector<1x1x32xf32>
    %166 = vector.shape_cast %165 : vector<1x1x32xf32> to vector<1x32xf32>
    %167 = vector.broadcast %166 : vector<1x32xf32> to vector<16x32xf32>
    %168 = arith.addf %164, %167 : vector<16x32xf32>
    %cst_68 = arith.constant 0.000000e+00 : f32
    %169 = vector.broadcast %cst_68 : f32 to vector<16x32xf32>
    %170 = arith.maximumf %168, %169 : vector<16x32xf32>
    %171 = arith.addf %110, %170 : vector<16x32xf32>
    %c1 = arith.constant 1 : index
    %c0_69 = arith.constant 0 : index
    %c0_70 = arith.constant 0 : index
    %172 = vector.load %arg13[%c1, %c0_69, %c0_70] : memref<2x1x32xf32, #tpu.memory_space<vmem>>, vector<1x1x32xf32>
    %173 = vector.shape_cast %172 : vector<1x1x32xf32> to vector<1x32xf32>
    %c1_71 = arith.constant 1 : index
    %c0_72 = arith.constant 0 : index
    %c0_73 = arith.constant 0 : index
    %174 = vector.load %arg14[%c1_71, %c0_72, %c0_73] : memref<2x1x32xf32, #tpu.memory_space<vmem>>, vector<1x1x32xf32>
    %175 = vector.shape_cast %174 : vector<1x1x32xf32> to vector<1x32xf32>
    %cst_74 = arith.constant dense<0.000000e+00> : vector<16xf32>
    %176 = vector.multi_reduction <add>, %171, %cst_74 [1] : vector<16x32xf32> to vector<16xf32>
    %177 = vector.shape_cast %176 : vector<16xf32> to vector<16x1xf32>
    %cst_75 = arith.constant 3.200000e+01 : f32
    %178 = vector.broadcast %cst_75 : f32 to vector<16x1xf32>
    %179 = arith.divf %177, %178 : vector<16x1xf32>
    %180 = vector.broadcast %179 : vector<16x1xf32> to vector<16x32xf32>
    %181 = arith.subf %171, %180 : vector<16x32xf32>
    %182 = arith.mulf %181, %181 : vector<16x32xf32>
    %cst_76 = arith.constant dense<0.000000e+00> : vector<16xf32>
    %183 = vector.multi_reduction <add>, %182, %cst_76 [1] : vector<16x32xf32> to vector<16xf32>
    %184 = vector.shape_cast %183 : vector<16xf32> to vector<16x1xf32>
    %cst_77 = arith.constant 0.0322580636 : f32
    %185 = vector.broadcast %cst_77 : f32 to vector<16x1xf32>
    %186 = arith.mulf %184, %185 : vector<16x1xf32>
    %187 = math.sqrt %186 : vector<16x1xf32>
    %cst_78 = arith.constant 9.99999997E-7 : f32
    %188 = vector.broadcast %cst_78 : f32 to vector<16x1xf32>
    %189 = arith.addf %187, %188 : vector<16x1xf32>
    %cst_79 = arith.constant 1.000000e+00 : f32
    %190 = vector.broadcast %cst_79 : f32 to vector<16x1xf32>
    %191 = arith.divf %190, %189 : vector<16x1xf32>
    %192 = vector.broadcast %173 : vector<1x32xf32> to vector<16x32xf32>
    %193 = arith.mulf %192, %181 : vector<16x32xf32>
    %194 = vector.broadcast %191 : vector<16x1xf32> to vector<16x32xf32>
    %195 = arith.mulf %193, %194 : vector<16x32xf32>
    %196 = vector.broadcast %175 : vector<1x32xf32> to vector<16x32xf32>
    %197 = arith.addf %195, %196 : vector<16x32xf32>
    %198 = arith.truncf %197 : vector<16x32xf32> to vector<16x32xbf16>
    %c1_80 = arith.constant 1 : index
    %c0_81 = arith.constant 0 : index
    %c0_82 = arith.constant 0 : index
    %199 = vector.load %arg7[%c1_80, %c0_81, %c0_82] : memref<2x32x128xbf16, #tpu.memory_space<vmem>>, vector<1x32x128xbf16>
    %200 = vector.shape_cast %199 : vector<1x32x128xbf16> to vector<32x128xbf16>
    %cst_83 = arith.constant dense<0.000000e+00> : vector<16x128xf32>
    %201 = tpu.matmul %198, %200, %cst_83 {dimension_numbers = #tpu.dot_dimension_numbers<[1], [0], [0], [1], [0, 0, 1, 1], [], []>} : vector<16x32xbf16>, vector<32x128xbf16>, vector<16x128xf32> -> vector<16x128xf32>
    %202 = vector.extract_strided_slice %201 {offsets = [0, 0], sizes = [16, 32], strides = [1, 1]} : vector<16x128xf32> to vector<16x32xf32>
    %203 = vector.extract_strided_slice %201 {offsets = [0, 32], sizes = [16, 32], strides = [1, 1]} : vector<16x128xf32> to vector<16x32xf32>
    %204 = vector.extract_strided_slice %201 {offsets = [0, 64], sizes = [16, 32], strides = [1, 1]} : vector<16x128xf32> to vector<16x32xf32>
    %205 = vector.extract_strided_slice %202 {offsets = [0, 0], sizes = [16, 8], strides = [1, 1]} : vector<16x32xf32> to vector<16x8xf32>
    %206 = vector.extract_strided_slice %202 {offsets = [0, 8], sizes = [16, 8], strides = [1, 1]} : vector<16x32xf32> to vector<16x8xf32>
    %207 = vector.extract_strided_slice %202 {offsets = [0, 16], sizes = [16, 8], strides = [1, 1]} : vector<16x32xf32> to vector<16x8xf32>
    %208 = vector.extract_strided_slice %202 {offsets = [0, 24], sizes = [16, 8], strides = [1, 1]} : vector<16x32xf32> to vector<16x8xf32>
    %209 = vector.shape_cast %205 : vector<16x8xf32> to vector<1x16x8xf32>
    %210 = vector.shape_cast %206 : vector<16x8xf32> to vector<1x16x8xf32>
    %211 = vector.shape_cast %207 : vector<16x8xf32> to vector<1x16x8xf32>
    %212 = vector.shape_cast %208 : vector<16x8xf32> to vector<1x16x8xf32>
    %213 = tpu.concatenate %209, %210, %211, %212 in 0 : vector<1x16x8xf32>, vector<1x16x8xf32>, vector<1x16x8xf32>, vector<1x16x8xf32> -> vector<4x16x8xf32>
    %214 = arith.truncf %213 : vector<4x16x8xf32> to vector<4x16x8xbf16>
    %215 = vector.extract_strided_slice %203 {offsets = [0, 0], sizes = [16, 8], strides = [1, 1]} : vector<16x32xf32> to vector<16x8xf32>
    %216 = vector.extract_strided_slice %203 {offsets = [0, 8], sizes = [16, 8], strides = [1, 1]} : vector<16x32xf32> to vector<16x8xf32>
    %217 = vector.extract_strided_slice %203 {offsets = [0, 16], sizes = [16, 8], strides = [1, 1]} : vector<16x32xf32> to vector<16x8xf32>
    %218 = vector.extract_strided_slice %203 {offsets = [0, 24], sizes = [16, 8], strides = [1, 1]} : vector<16x32xf32> to vector<16x8xf32>
    %219 = vector.shape_cast %215 : vector<16x8xf32> to vector<1x16x8xf32>
    %220 = vector.shape_cast %216 : vector<16x8xf32> to vector<1x16x8xf32>
    %221 = vector.shape_cast %217 : vector<16x8xf32> to vector<1x16x8xf32>
    %222 = vector.shape_cast %218 : vector<16x8xf32> to vector<1x16x8xf32>
    %223 = tpu.concatenate %219, %220, %221, %222 in 0 : vector<1x16x8xf32>, vector<1x16x8xf32>, vector<1x16x8xf32>, vector<1x16x8xf32> -> vector<4x16x8xf32>
    %224 = arith.truncf %223 : vector<4x16x8xf32> to vector<4x16x8xbf16>
    %225 = vector.extract_strided_slice %204 {offsets = [0, 0], sizes = [16, 8], strides = [1, 1]} : vector<16x32xf32> to vector<16x8xf32>
    %226 = vector.extract_strided_slice %204 {offsets = [0, 8], sizes = [16, 8], strides = [1, 1]} : vector<16x32xf32> to vector<16x8xf32>
    %227 = vector.extract_strided_slice %204 {offsets = [0, 16], sizes = [16, 8], strides = [1, 1]} : vector<16x32xf32> to vector<16x8xf32>
    %228 = vector.extract_strided_slice %204 {offsets = [0, 24], sizes = [16, 8], strides = [1, 1]} : vector<16x32xf32> to vector<16x8xf32>
    %229 = vector.shape_cast %225 : vector<16x8xf32> to vector<1x16x8xf32>
    %230 = vector.shape_cast %226 : vector<16x8xf32> to vector<1x16x8xf32>
    %231 = vector.shape_cast %227 : vector<16x8xf32> to vector<1x16x8xf32>
    %232 = vector.shape_cast %228 : vector<16x8xf32> to vector<1x16x8xf32>
    %233 = tpu.concatenate %229, %230, %231, %232 in 0 : vector<1x16x8xf32>, vector<1x16x8xf32>, vector<1x16x8xf32>, vector<1x16x8xf32> -> vector<4x16x8xf32>
    %234 = arith.truncf %233 : vector<4x16x8xf32> to vector<4x16x8xbf16>
    "tpu.trace_start"() <{level = 10 : i32, message = "hqd,hkd->hqk"}> : () -> ()
    %cst_84 = arith.constant dense<0.000000e+00> : vector<4x16x16xf32>
    %235 = tpu.matmul %214, %224, %cst_84 {dimension_numbers = #tpu.dot_dimension_numbers<[2], [2], [1], [1], [0, 0, 0, 1, 1, 1], [0], [0]>} : vector<4x16x8xbf16>, vector<4x16x8xbf16>, vector<4x16x16xf32> -> vector<4x16x16xf32>
    "tpu.trace_stop"() : () -> ()
    %236 = arith.addf %235, %17 : vector<4x16x16xf32>
    %cst_85 = arith.constant dense<0xFF800000> : vector<4x16xf32>
    %237 = vector.multi_reduction <maximumf>, %236, %cst_85 [2] : vector<4x16x16xf32> to vector<4x16xf32>
    %238 = vector.shape_cast %237 : vector<4x16xf32> to vector<4x16x1xf32>
    %239 = vector.broadcast %238 : vector<4x16x1xf32> to vector<4x16x16xf32>
    %240 = arith.subf %236, %239 : vector<4x16x16xf32>
    %241 = math.exp %240 : vector<4x16x16xf32>
    %cst_86 = arith.constant dense<0.000000e+00> : vector<4x16xf32>
    %242 = vector.multi_reduction <add>, %241, %cst_86 [2] : vector<4x16x16xf32> to vector<4x16xf32>
    %243 = vector.shape_cast %242 : vector<4x16xf32> to vector<4x16x1xf32>
    %244 = tpu.reciprocal %243 {approx = true} : vector<4x16x1xf32> -> vector<4x16x1xf32>
    %245 = vector.broadcast %244 : vector<4x16x1xf32> to vector<4x16x16xf32>
    %246 = arith.mulf %241, %245 : vector<4x16x16xf32>
    %247 = arith.truncf %246 : vector<4x16x16xf32> to vector<4x16x16xbf16>
    "tpu.trace_start"() <{level = 10 : i32, message = "hqk,hkd->hqd"}> : () -> ()
    %cst_87 = arith.constant dense<0.000000e+00> : vector<4x16x8xf32>
    %248 = tpu.matmul %247, %234, %cst_87 {dimension_numbers = #tpu.dot_dimension_numbers<[2], [1], [1], [2], [0, 0, 0, 1, 1, 2], [0], [0]>} : vector<4x16x16xbf16>, vector<4x16x8xbf16>, vector<4x16x8xf32> -> vector<4x16x8xf32>
    "tpu.trace_stop"() : () -> ()
    %249 = vector.extract_strided_slice %248 {offsets = [0, 0, 0], sizes = [1, 16, 8], strides = [1, 1, 1]} : vector<4x16x8xf32> to vector<1x16x8xf32>
    %250 = vector.shape_cast %249 : vector<1x16x8xf32> to vector<16x8xf32>
    %251 = vector.extract_strided_slice %248 {offsets = [1, 0, 0], sizes = [1, 16, 8], strides = [1, 1, 1]} : vector<4x16x8xf32> to vector<1x16x8xf32>
    %252 = vector.shape_cast %251 : vector<1x16x8xf32> to vector<16x8xf32>
    %253 = vector.extract_strided_slice %248 {offsets = [2, 0, 0], sizes = [1, 16, 8], strides = [1, 1, 1]} : vector<4x16x8xf32> to vector<1x16x8xf32>
    %254 = vector.shape_cast %253 : vector<1x16x8xf32> to vector<16x8xf32>
    %255 = vector.extract_strided_slice %248 {offsets = [3, 0, 0], sizes = [1, 16, 8], strides = [1, 1, 1]} : vector<4x16x8xf32> to vector<1x16x8xf32>
    %256 = vector.shape_cast %255 : vector<1x16x8xf32> to vector<16x8xf32>
    %257 = tpu.concatenate %250, %252, %254, %256 in 1 : vector<16x8xf32>, vector<16x8xf32>, vector<16x8xf32>, vector<16x8xf32> -> vector<16x32xf32>
    %258 = arith.truncf %257 : vector<16x32xf32> to vector<16x32xbf16>
    %c1_88 = arith.constant 1 : index
    %c0_89 = arith.constant 0 : index
    %c0_90 = arith.constant 0 : index
    %259 = vector.load %arg8[%c1_88, %c0_89, %c0_90] : memref<2x32x32xbf16, #tpu.memory_space<vmem>>, vector<1x32x32xbf16>
    %260 = vector.shape_cast %259 : vector<1x32x32xbf16> to vector<32x32xbf16>
    %cst_91 = arith.constant dense<0.000000e+00> : vector<16x32xf32>
    %261 = tpu.matmul %258, %260, %cst_91 {dimension_numbers = #tpu.dot_dimension_numbers<[1], [0], [0], [1], [0, 0, 1, 1], [], []>} : vector<16x32xbf16>, vector<32x32xbf16>, vector<16x32xf32> -> vector<16x32xf32>
    %262 = arith.addf %171, %261 : vector<16x32xf32>
    %c1_92 = arith.constant 1 : index
    %c0_93 = arith.constant 0 : index
    %c0_94 = arith.constant 0 : index
    %263 = vector.load %arg15[%c1_92, %c0_93, %c0_94] : memref<2x1x32xf32, #tpu.memory_space<vmem>>, vector<1x1x32xf32>
    %264 = vector.shape_cast %263 : vector<1x1x32xf32> to vector<1x32xf32>
    %c1_95 = arith.constant 1 : index
    %c0_96 = arith.constant 0 : index
    %c0_97 = arith.constant 0 : index
    %265 = vector.load %arg16[%c1_95, %c0_96, %c0_97] : memref<2x1x32xf32, #tpu.memory_space<vmem>>, vector<1x1x32xf32>
    %266 = vector.shape_cast %265 : vector<1x1x32xf32> to vector<1x32xf32>
    %cst_98 = arith.constant dense<0.000000e+00> : vector<16xf32>
    %267 = vector.multi_reduction <add>, %262, %cst_98 [1] : vector<16x32xf32> to vector<16xf32>
    %268 = vector.shape_cast %267 : vector<16xf32> to vector<16x1xf32>
    %cst_99 = arith.constant 3.200000e+01 : f32
    %269 = vector.broadcast %cst_99 : f32 to vector<16x1xf32>
    %270 = arith.divf %268, %269 : vector<16x1xf32>
    %271 = vector.broadcast %270 : vector<16x1xf32> to vector<16x32xf32>
    %272 = arith.subf %262, %271 : vector<16x32xf32>
    %273 = arith.mulf %272, %272 : vector<16x32xf32>
    %cst_100 = arith.constant dense<0.000000e+00> : vector<16xf32>
    %274 = vector.multi_reduction <add>, %273, %cst_100 [1] : vector<16x32xf32> to vector<16xf32>
    %275 = vector.shape_cast %274 : vector<16xf32> to vector<16x1xf32>
    %cst_101 = arith.constant 0.0322580636 : f32
    %276 = vector.broadcast %cst_101 : f32 to vector<16x1xf32>
    %277 = arith.mulf %275, %276 : vector<16x1xf32>
    %278 = math.sqrt %277 : vector<16x1xf32>
    %cst_102 = arith.constant 9.99999997E-7 : f32
    %279 = vector.broadcast %cst_102 : f32 to vector<16x1xf32>
    %280 = arith.addf %278, %279 : vector<16x1xf32>
    %cst_103 = arith.constant 1.000000e+00 : f32
    %281 = vector.broadcast %cst_103 : f32 to vector<16x1xf32>
    %282 = arith.divf %281, %280 : vector<16x1xf32>
    %283 = vector.broadcast %264 : vector<1x32xf32> to vector<16x32xf32>
    %284 = arith.mulf %283, %272 : vector<16x32xf32>
    %285 = vector.broadcast %282 : vector<16x1xf32> to vector<16x32xf32>
    %286 = arith.mulf %284, %285 : vector<16x32xf32>
    %287 = vector.broadcast %266 : vector<1x32xf32> to vector<16x32xf32>
    %288 = arith.addf %286, %287 : vector<16x32xf32>
    %c1_i32_104 = arith.constant 1 : i32
    %289 = tpu.dynamic_rotate %288 by %c1_i32_104 dim 0 : vector<16x32xf32>, i32 -> vector<16x32xf32>
    %290 = vector.broadcast %18 : vector<16x1xf32> to vector<16x32xf32>
    %291 = arith.mulf %289, %290 : vector<16x32xf32>
    %c15_i32_105 = arith.constant 15 : i32
    %292 = tpu.dynamic_rotate %288 by %c15_i32_105 dim 0 : vector<16x32xf32>, i32 -> vector<16x32xf32>
    %293 = vector.broadcast %19 : vector<16x1xf32> to vector<16x32xf32>
    %294 = arith.mulf %292, %293 : vector<16x32xf32>
    %295 = tpu.concatenate %291, %288, %294 in 1 : vector<16x32xf32>, vector<16x32xf32>, vector<16x32xf32> -> vector<16x96xf32>
    %296 = arith.truncf %295 : vector<16x96xf32> to vector<16x96xbf16>
    %c1_106 = arith.constant 1 : index
    %c0_107 = arith.constant 0 : index
    %c0_108 = arith.constant 0 : index
    %297 = vector.load %arg9[%c1_106, %c0_107, %c0_108] : memref<2x96x64xbf16, #tpu.memory_space<vmem>>, vector<1x96x64xbf16>
    %298 = vector.shape_cast %297 : vector<1x96x64xbf16> to vector<96x64xbf16>
    %cst_109 = arith.constant dense<0.000000e+00> : vector<16x64xf32>
    %299 = tpu.matmul %296, %298, %cst_109 {dimension_numbers = #tpu.dot_dimension_numbers<[1], [0], [0], [1], [0, 0, 1, 1], [], []>} : vector<16x96xbf16>, vector<96x64xbf16>, vector<16x64xf32> -> vector<16x64xf32>
    %c1_110 = arith.constant 1 : index
    %c0_111 = arith.constant 0 : index
    %c0_112 = arith.constant 0 : index
    %300 = vector.load %arg10[%c1_110, %c0_111, %c0_112] : memref<2x1x64xf32, #tpu.memory_space<vmem>>, vector<1x1x64xf32>
    %301 = vector.shape_cast %300 : vector<1x1x64xf32> to vector<1x64xf32>
    %302 = vector.broadcast %301 : vector<1x64xf32> to vector<16x64xf32>
    %303 = arith.addf %299, %302 : vector<16x64xf32>
    %cst_113 = arith.constant 0.000000e+00 : f32
    %304 = vector.broadcast %cst_113 : f32 to vector<16x64xf32>
    %305 = arith.maximumf %303, %304 : vector<16x64xf32>
    %c1_i32_114 = arith.constant 1 : i32
    %306 = tpu.dynamic_rotate %305 by %c1_i32_114 dim 0 : vector<16x64xf32>, i32 -> vector<16x64xf32>
    %307 = vector.broadcast %18 : vector<16x1xf32> to vector<16x64xf32>
    %308 = arith.mulf %306, %307 : vector<16x64xf32>
    %c15_i32_115 = arith.constant 15 : i32
    %309 = tpu.dynamic_rotate %305 by %c15_i32_115 dim 0 : vector<16x64xf32>, i32 -> vector<16x64xf32>
    %310 = vector.broadcast %19 : vector<16x1xf32> to vector<16x64xf32>
    %311 = arith.mulf %309, %310 : vector<16x64xf32>
    %312 = tpu.concatenate %308, %305, %311 in 1 : vector<16x64xf32>, vector<16x64xf32>, vector<16x64xf32> -> vector<16x192xf32>
    %313 = arith.truncf %312 : vector<16x192xf32> to vector<16x192xbf16>
    %c1_116 = arith.constant 1 : index
    %c0_117 = arith.constant 0 : index
    %c0_118 = arith.constant 0 : index
    %314 = vector.load %arg11[%c1_116, %c0_117, %c0_118] : memref<2x192x32xbf16, #tpu.memory_space<vmem>>, vector<1x192x32xbf16>
    %315 = vector.shape_cast %314 : vector<1x192x32xbf16> to vector<192x32xbf16>
    %cst_119 = arith.constant dense<0.000000e+00> : vector<16x32xf32>
    %316 = tpu.matmul %313, %315, %cst_119 {dimension_numbers = #tpu.dot_dimension_numbers<[1], [0], [0], [1], [0, 0, 1, 1], [], []>} : vector<16x192xbf16>, vector<192x32xbf16>, vector<16x32xf32> -> vector<16x32xf32>
    %c1_120 = arith.constant 1 : index
    %c0_121 = arith.constant 0 : index
    %c0_122 = arith.constant 0 : index
    %317 = vector.load %arg12[%c1_120, %c0_121, %c0_122] : memref<2x1x32xf32, #tpu.memory_space<vmem>>, vector<1x1x32xf32>
    %318 = vector.shape_cast %317 : vector<1x1x32xf32> to vector<1x32xf32>
    %319 = vector.broadcast %318 : vector<1x32xf32> to vector<16x32xf32>
    %320 = arith.addf %316, %319 : vector<16x32xf32>
    %cst_123 = arith.constant 0.000000e+00 : f32
    %321 = vector.broadcast %cst_123 : f32 to vector<16x32xf32>
    %322 = arith.maximumf %320, %321 : vector<16x32xf32>
    %323 = arith.addf %262, %322 : vector<16x32xf32>
    %c0_124 = arith.constant 0 : index
    %c0_125 = arith.constant 0 : index
    %324 = vector.load %arg17[%c0_124, %c0_125] : memref<1x32xf32, #tpu.memory_space<vmem>>, vector<1x32xf32>
    %c0_126 = arith.constant 0 : index
    %c0_127 = arith.constant 0 : index
    %325 = vector.load %arg18[%c0_126, %c0_127] : memref<1x32xf32, #tpu.memory_space<vmem>>, vector<1x32xf32>
    %cst_128 = arith.constant dense<0.000000e+00> : vector<16xf32>
    %326 = vector.multi_reduction <add>, %323, %cst_128 [1] : vector<16x32xf32> to vector<16xf32>
    %327 = vector.shape_cast %326 : vector<16xf32> to vector<16x1xf32>
    %cst_129 = arith.constant 3.200000e+01 : f32
    %328 = vector.broadcast %cst_129 : f32 to vector<16x1xf32>
    %329 = arith.divf %327, %328 : vector<16x1xf32>
    %330 = vector.broadcast %329 : vector<16x1xf32> to vector<16x32xf32>
    %331 = arith.subf %323, %330 : vector<16x32xf32>
    %332 = arith.mulf %331, %331 : vector<16x32xf32>
    %cst_130 = arith.constant dense<0.000000e+00> : vector<16xf32>
    %333 = vector.multi_reduction <add>, %332, %cst_130 [1] : vector<16x32xf32> to vector<16xf32>
    %334 = vector.shape_cast %333 : vector<16xf32> to vector<16x1xf32>
    %cst_131 = arith.constant 0.0322580636 : f32
    %335 = vector.broadcast %cst_131 : f32 to vector<16x1xf32>
    %336 = arith.mulf %334, %335 : vector<16x1xf32>
    %337 = math.sqrt %336 : vector<16x1xf32>
    %cst_132 = arith.constant 9.99999997E-7 : f32
    %338 = vector.broadcast %cst_132 : f32 to vector<16x1xf32>
    %339 = arith.addf %337, %338 : vector<16x1xf32>
    %cst_133 = arith.constant 1.000000e+00 : f32
    %340 = vector.broadcast %cst_133 : f32 to vector<16x1xf32>
    %341 = arith.divf %340, %339 : vector<16x1xf32>
    %342 = vector.broadcast %324 : vector<1x32xf32> to vector<16x32xf32>
    %343 = arith.mulf %342, %331 : vector<16x32xf32>
    %344 = vector.broadcast %341 : vector<16x1xf32> to vector<16x32xf32>
    %345 = arith.mulf %343, %344 : vector<16x32xf32>
    %346 = vector.broadcast %325 : vector<1x32xf32> to vector<16x32xf32>
    %347 = arith.addf %345, %346 : vector<16x32xf32>
    %c0_134 = arith.constant 0 : index
    %c0_135 = arith.constant 0 : index
    %348 = vector.load %arg19[%c0_134, %c0_135] : memref<16x32xf32, #tpu.memory_space<vmem>>, vector<16x32xf32>
    tpu.vector_store %arg19[%c0_134, %c0_135], %347 {strides = array<i32>} : memref<16x32xf32, #tpu.memory_space<vmem>>, vector<16x32xf32>,
    return
  }
}

</mosaic_0001>

<llo_original>
// kernel: tpu_custom_call.1
$region0: #{tpu_custom_call.1}
  #allocation0 [shape = 'u32[]', space=smem, size = 0x4, offset = 0x4, fixed_abs, tag = 'smem constant byte address 0x4 - core index']
  #allocation1 [shape = 'u32[72,128]{1,0:T(1,128)}', space=vmem, size = 0x9000, scoped, tag = 'internal scratch']
  %s0 = inlined_call_operand.vmem [shape: f32[16,48], index: 0, kind: input, shape index: {}]
  %s1 = inlined_call_operand.vmem [shape: f32[8,32], index: 1, kind: input, shape index: {}]
  %s2 = inlined_call_operand.vmem [shape: f32[16,1], index: 2, kind: input, shape index: {}]
  %s3 = inlined_call_operand.vmem [shape: f32[1,16], index: 3, kind: input, shape index: {}]
  %s4 = inlined_call_operand.vmem [shape: f32[16,1], index: 4, kind: input, shape index: {}]
  %s5 = inlined_call_operand.vmem [shape: f32[16,1], index: 5, kind: input, shape index: {}]
  %s6 = inlined_call_operand.vmem [shape: bf16[48,32], index: 6, kind: input, shape index: {}]
  %s7 = inlined_call_operand.vmem [shape: bf16[2,32,128], index: 7, kind: input, shape index: {}]
  %s8 = inlined_call_operand.vmem [shape: bf16[2,32,32], index: 8, kind: input, shape index: {}]
  %s9 = inlined_call_operand.vmem [shape: bf16[2,96,64], index: 9, kind: input, shape index: {}]
  %s10 = inlined_call_operand.vmem [shape: f32[2,1,64], index: 10, kind: input, shape index: {}]
  %s11 = inlined_call_operand.vmem [shape: bf16[2,192,32], index: 11, kind: input, shape index: {}]
  %s12 = inlined_call_operand.vmem [shape: f32[2,1,32], index: 12, kind: input, shape index: {}]
  %s13 = inlined_call_operand.vmem [shape: f32[2,1,32], index: 13, kind: input, shape index: {}]
  %s14 = inlined_call_operand.vmem [shape: f32[2,1,32], index: 14, kind: input, shape index: {}]
  %s15 = inlined_call_operand.vmem [shape: f32[2,1,32], index: 15, kind: input, shape index: {}]
  %s16 = inlined_call_operand.vmem [shape: f32[2,1,32], index: 16, kind: input, shape index: {}]
  %s17 = inlined_call_operand.vmem [shape: f32[1,32], index: 17, kind: input, shape index: {}]
  %s18 = inlined_call_operand.vmem [shape: f32[1,32], index: 18, kind: input, shape index: {}]
  %s19 = inlined_call_operand.hbm [shape: f32[16,32], index: 19, kind: output, shape index: {}]
  %s20 = sld [smem:[#allocation0]]
  $region86: #{tpu_custom_call.1} parent=0
    _
  %s22 = ssub.s32 1, %s20
  %s23 = scalar_select 0, %s22, %s20
  $region1: #{tpu_custom_call.1} parent=0
    #allocation2 [shape = 'u8[8192]{0}', space=vmem, size = 0x2000, scoped, tag = 'output window, operand 0, single buffered']
    #allocation3 [shape = 's32[1]{0}', space=sflag, size = 0x4, scoped, tag = 'scoped memory for tpu_custom_call.1']
    %24 = vsyncpa [#allocation3], 0
    // Predicated region
    $region2: #{tpu_custom_call.1} parent=1 // pred_check
      _
    $region3: #{tpu_custom_call.1} parent=1 // pred_check_branch
      %26 = sbr.rel (0) target = $region5
    $region4: #{tpu_custom_call.1} parent=1 // pred_region
      _
    $region5: #{tpu_custom_call.1} parent=1 // pred_fallthru
      _
    // Predicated region
    $region6: #{tpu_custom_call.1} parent=1 // pred_check
      _
    $region7: #{tpu_custom_call.1} parent=1 // pred_check_branch
      %28 = sbr.rel (0) target = $region9
    $region8: #{tpu_custom_call.1} parent=1 // pred_region
      _
    $region9: #{tpu_custom_call.1} parent=1 // pred_fallthru
      _
    // Predicated region
    $region10: #{tpu_custom_call.1} parent=1 // pred_check
      _
    $region11: #{tpu_custom_call.1} parent=1 // pred_check_branch
      %30 = sbr.rel (0) target = $region13
    $region12: #{tpu_custom_call.1} parent=1 // pred_region
      _
    $region13: #{tpu_custom_call.1} parent=1 // pred_fallthru
      _
    // Predicated region
    $region14: #{tpu_custom_call.1} parent=1 // pred_check
      _
    $region15: #{tpu_custom_call.1} parent=1 // pred_check_branch
      %32 = sbr.rel (0) target = $region17
    $region16: #{tpu_custom_call.1} parent=1 // pred_region
      _
    $region17: #{tpu_custom_call.1} parent=1 // pred_fallthru
      _
    // Predicated region
    $region18: #{tpu_custom_call.1} parent=1 // pred_check
      _
    $region19: #{tpu_custom_call.1} parent=1 // pred_check_branch
      %34 = sbr.rel (0) target = $region21
    $region20: #{tpu_custom_call.1} parent=1 // pred_region
      _
    $region21: #{tpu_custom_call.1} parent=1 // pred_fallthru
      _
    // Predicated region
    $region22: #{tpu_custom_call.1} parent=1 // pred_check
      _
    $region23: #{tpu_custom_call.1} parent=1 // pred_check_branch
      %36 = sbr.rel (0) target = $region25
    $region24: #{tpu_custom_call.1} parent=1 // pred_region
      _
    $region25: #{tpu_custom_call.1} parent=1 // pred_fallthru
      _
    // Predicated region
    $region26: #{tpu_custom_call.1} parent=1 // pred_check
      _
    $region27: #{tpu_custom_call.1} parent=1 // pred_check_branch
      %38 = sbr.rel (0) target = $region29
    $region28: #{tpu_custom_call.1} parent=1 // pred_region
      _
    $region29: #{tpu_custom_call.1} parent=1 // pred_fallthru
      _
    // Predicated region
    $region30: #{tpu_custom_call.1} parent=1 // pred_check
      _
    $region31: #{tpu_custom_call.1} parent=1 // pred_check_branch
      %40 = sbr.rel (0) target = $region33
    $region32: #{tpu_custom_call.1} parent=1 // pred_region
      _
    $region33: #{tpu_custom_call.1} parent=1 // pred_fallthru
      _
    // Predicated region
    $region34: #{tpu_custom_call.1} parent=1 // pred_check
      _
    $region35: #{tpu_custom_call.1} parent=1 // pred_check_branch
      %42 = sbr.rel (0) target = $region37
    $region36: #{tpu_custom_call.1} parent=1 // pred_region
      _
    $region37: #{tpu_custom_call.1} parent=1 // pred_fallthru
      _
    // Predicated region
    $region38: #{tpu_custom_call.1} parent=1 // pred_check
      _
    $region39: #{tpu_custom_call.1} parent=1 // pred_check_branch
      %44 = sbr.rel (0) target = $region41
    $region40: #{tpu_custom_call.1} parent=1 // pred_region
      _
    $region41: #{tpu_custom_call.1} parent=1 // pred_fallthru
      _
    // Predicated region
    $region42: #{tpu_custom_call.1} parent=1 // pred_check
      _
    $region43: #{tpu_custom_call.1} parent=1 // pred_check_branch
      %46 = sbr.rel (0) target = $region45
    $region44: #{tpu_custom_call.1} parent=1 // pred_region
      _
    $region45: #{tpu_custom_call.1} parent=1 // pred_fallthru
      _
    // Predicated region
    $region46: #{tpu_custom_call.1} parent=1 // pred_check
      _
    $region47: #{tpu_custom_call.1} parent=1 // pred_check_branch
      %48 = sbr.rel (0) target = $region49
    $region48: #{tpu_custom_call.1} parent=1 // pred_region
      _
    $region49: #{tpu_custom_call.1} parent=1 // pred_fallthru
      _
    // Predicated region
    $region50: #{tpu_custom_call.1} parent=1 // pred_check
      _
    $region51: #{tpu_custom_call.1} parent=1 // pred_check_branch
      %50 = sbr.rel (0) target = $region53
    $region52: #{tpu_custom_call.1} parent=1 // pred_region
      _
    $region53: #{tpu_custom_call.1} parent=1 // pred_fallthru
      _
    // Predicated region
    $region54: #{tpu_custom_call.1} parent=1 // pred_check
      _
    $region55: #{tpu_custom_call.1} parent=1 // pred_check_branch
      %52 = sbr.rel (0) target = $region57
    $region56: #{tpu_custom_call.1} parent=1 // pred_region
      _
    $region57: #{tpu_custom_call.1} parent=1 // pred_fallthru
      _
    // Predicated region
    $region58: #{tpu_custom_call.1} parent=1 // pred_check
      _
    $region59: #{tpu_custom_call.1} parent=1 // pred_check_branch
      %54 = sbr.rel (0) target = $region61
    $region60: #{tpu_custom_call.1} parent=1 // pred_region
      _
    $region61: #{tpu_custom_call.1} parent=1 // pred_fallthru
      _
    // Predicated region
    $region62: #{tpu_custom_call.1} parent=1 // pred_check
      _
    $region63: #{tpu_custom_call.1} parent=1 // pred_check_branch
      %56 = sbr.rel (0) target = $region65
    $region64: #{tpu_custom_call.1} parent=1 // pred_region
      _
    $region65: #{tpu_custom_call.1} parent=1 // pred_fallthru
      _
    // Predicated region
    $region66: #{tpu_custom_call.1} parent=1 // pred_check
      _
    $region67: #{tpu_custom_call.1} parent=1 // pred_check_branch
      %58 = sbr.rel (0) target = $region69
    $region68: #{tpu_custom_call.1} parent=1 // pred_region
      _
    $region69: #{tpu_custom_call.1} parent=1 // pred_fallthru
      _
    // Predicated region
    $region70: #{tpu_custom_call.1} parent=1 // pred_check
      _
    $region71: #{tpu_custom_call.1} parent=1 // pred_check_branch
      %60 = sbr.rel (0) target = $region73
    $region72: #{tpu_custom_call.1} parent=1 // pred_region
      _
    $region73: #{tpu_custom_call.1} parent=1 // pred_fallthru
      _
    // Predicated region
    $region74: #{tpu_custom_call.1} parent=1 // pred_check
      _
    $region75: #{tpu_custom_call.1} parent=1 // pred_check_branch
      %62 = sbr.rel (0) target = $region77
    $region76: #{tpu_custom_call.1} parent=1 // pred_region
      _
    $region77: #{tpu_custom_call.1} parent=1 // pred_fallthru
      _
    %v64 = vld [vmem:[%s0] sm:$0xff]
    %v65 = vld [vmem:[%s0 + $0x8] sm:$0xff]
    %v66 = vpack.c.bf16 %v65, %v64
    %v67 = vld [vmem:[%s6] sm:$0xf]
    %v68 = vld [vmem:[%s6 + $0x4] sm:$0xf]
    %v69 = vld [vmem:[%s6 + $0x8] sm:$0xf]
    %v70 = vld [vmem:[%s6 + $0xc] sm:$0xf]
    %v71 = vld [vmem:[%s6 + $0x10] sm:$0xf]
    %v72 = vld [vmem:[%s6 + $0x14] sm:$0xf]
    %v73 = vld [vmem:[%s1] sm:$0xff]
    %v80 = vunpack.c.l.b16 %v67
    %v81 = vunpack.c.l.b16 %v68
    %v82 = vunpack.c.l.b16 %v69
    %v83 = vunpack.c.l.b16 %v70
    %v84 = vunpack.c.l.b16 %v71
    %v85 = vunpack.c.l.b16 %v72
    %v86 = vpack.c.b16 %v81, %v80
    %v87 = vpack.c.b16 %v83, %v82
    %v88 = vpack.c.b16 %v85, %v84
    %vm92 = vcmask 392192
    %v94 = vsel %vm92, %v66, 0
    %96 = vmatpush.bf16.msra.mxu0 0
    %97 = vmatpush.bf16.msra.mxu0 0
    %98 = vmatpush.bf16.msra.mxu0 0
    %99 = vmatpush.bf16.msra.mxu0 0
    %100 = vmatpush.bf16.msra.mxu0 0
    %101 = vmatpush.bf16.msra.mxu0 %v88
    %102 = vmatpush.bf16.msra.mxu0 %v87
    %103 = vmatpush.bf16.msra.mxu0 %v86
    %104 = vmatmul.bf16.gmra.mxu0 %v94
    %v105 = vpop.f32.mrf.mxu0
    %v106 = vadd.f32 %v73, %v105
    %v107 = vpop.f32.mrf.mxu0
    %v108 = vadd.f32 %v73, %v107
    %109 = vdwg.mxu0
    %v110 = vld [vmem:[%s2] sm:$0xff]
    %v111 = vld [vmem:[%s2 + $0x8] sm:$0xff]
    %v112 = vld [vmem:[%s3] sm:$0x1]
    %114 = vset.pattern.permute.xlu0 0
    %115 = vperm.xlu0 %114, %v110
    %v116 = vpop.permute.xlu0 %115
    %119 = vset.pattern.permute.xlu0 0
    %120 = vperm.xlu0 %119, %v111
    %v121 = vpop.permute.xlu0 %120
    %v124 = vperm.slane %v112, 0
    %vm126 = vcmp.eq.f32.partialorder %v116, %v124
    %vm127 = vcmp.eq.f32.partialorder %v121, %v124
    %v128 = vsel %vm126, 0.0, -1e+09
    %v129 = vsel %vm127, 0.0, -1e+09
    %v130 = vld [vmem:[%s4] sm:$0xff]
    %v131 = vld [vmem:[%s4 + $0x8] sm:$0xff]
    %v132 = vld [vmem:[%s5] sm:$0xff]
    %v133 = vld [vmem:[%s5 + $0x8] sm:$0xff]
    %v134 = vld [vmem:[%s13] sm:$0x1]
    %v135 = vld [vmem:[%s14] sm:$0x1]
    %vm136 = vcmask 261120
    %v137 = vsel %vm136, %v106, 0.0
    %138 = vadd.xlane.f32.xlu0 %v137
    %v139 = vpop.xlane.xlu0 %138
    %v140 = vsel %vm136, %v108, 0.0
    %141 = vadd.xlane.f32.xlu0 %v140
    %v142 = vpop.xlane.xlu0 %141
    %v143 = vrcp.pop 32.0
    %v144 = vmul.f32 32.0, %v143
    %v145 = vsub.f32 1.0, %v144
    %v146 = vmul.f32 %v143, %v145
    %v147 = vadd.f32 %v143, %v146
    %vm148 = vweird.f32 %v143
    %v149 = vsel %vm148, %v143, %v147
    %v150 = vmul.f32 %v139, %v149
    %v151 = vmul.f32 %v142, %v149
    %v152 = vsub.f32 %v106, %v150
    %v153 = vsub.f32 %v108, %v151
    %v154 = vmul.f32 %v152, %v152
    %v155 = vmul.f32 %v153, %v153
    %v156 = vsel %vm136, %v154, 0.0
    %157 = vadd.xlane.f32.xlu0 %v156
    %v158 = vpop.xlane.xlu0 %157
    %v159 = vsel %vm136, %v155, 0.0
    %160 = vadd.xlane.f32.xlu0 %v159
    %v161 = vpop.xlane.xlu0 %160
    %v162 = vmul.f32 %v158, 0.032258064
    %v163 = vmul.f32 %v161, 0.032258064
    %v164 = vrsqrt.pop %v162
    %v165 = vmul.f32 %v164, %v162
    %v166 = vmul.f32 %v165, %v164
    %v167 = vmul.f32 0.5, %v166
    %v168 = vsub.f32 1.5, %v167
    %v169 = vmul.f32 %v164, %v168
    %v170 = vmul.f32 %v162, %v169
    %vm171 = vcmp.eq.f32.partialorder %v162, inf
    %v172 = vsel %vm171, %v162, %v170
    %vm173 = vcmp.eq.f32.partialorder %v162, 0.0
    %v174 = vand.u32 %v162, 2147483648
    %v175 = vsel %vm173, %v174, %v172
    %v176 = vrsqrt.pop %v163
    %v177 = vmul.f32 %v176, %v163
    %v178 = vmul.f32 %v177, %v176
    %v179 = vmul.f32 0.5, %v178
    %v180 = vsub.f32 1.5, %v179
    %v181 = vmul.f32 %v176, %v180
    %v182 = vmul.f32 %v163, %v181
    %vm183 = vcmp.eq.f32.partialorder %v163, inf
    %v184 = vsel %vm183, %v163, %v182
    %vm185 = vcmp.eq.f32.partialorder %v163, 0.0
    %v186 = vand.u32 %v163, 2147483648
    %v187 = vsel %vm185, %v186, %v184
    %v188 = vadd.f32 %v175, 1e-06
    %v189 = vadd.f32 %v187, 1e-06
    %v190 = vrcp.pop %v188
    %v191 = vmul.f32 %v188, %v190
    %v192 = vsub.f32 1.0, %v191
    %v193 = vmul.f32 %v190, %v192
    %v194 = vadd.f32 %v190, %v193
    %vm195 = vweird.f32 %v188
    %vm196 = vweird.f32 %v190
    %vm197 = vmor %vm195, %vm196
    %v198 = vsel %vm197, %v190, %v194
    %v199 = vand.u32 2147483647, %v188
    %vm200 = vcmp.eq.f32.partialorder %v199, 8.507059e+37
    %v201 = vand.u32 %v188, 2147483648
    %v202 = vor.u32 1.1754944e-38, %v201
    %v203 = vsel %vm200, %v202, %v198
    %v204 = vmul.f32 1.0, %v203
    %v205 = vrcp.pop %v189
    %v206 = vmul.f32 %v189, %v205
    %v207 = vsub.f32 1.0, %v206
    %v208 = vmul.f32 %v205, %v207
    %v209 = vadd.f32 %v205, %v208
    %vm210 = vweird.f32 %v189
    %vm211 = vweird.f32 %v205
    %vm212 = vmor %vm210, %vm211
    %v213 = vsel %vm212, %v205, %v209
    %v214 = vand.u32 2147483647, %v189
    %vm215 = vcmp.eq.f32.partialorder %v214, 8.507059e+37
    %v216 = vand.u32 %v189, 2147483648
    %v217 = vor.u32 1.1754944e-38, %v216
    %v218 = vsel %vm215, %v217, %v213
    %v219 = vmul.f32 1.0, %v218
    %v221 = vperm.slane %v134, 0
    %v223 = vmul.f32 %v221, %v152
    %v224 = vmul.f32 %v221, %v153
    %v225 = vmul.f32 %v223, %v204
    %v226 = vmul.f32 %v224, %v219
    %v228 = vperm.slane %v135, 0
    %v230 = vadd.f32 %v225, %v228
    %v231 = vadd.f32 %v226, %v228
    %v232 = vpack.c.bf16 %v231, %v230
    %v233 = vld [vmem:[%s7] sm:$0xf]
    %v234 = vld [vmem:[%s7 + $0x4] sm:$0xf]
    %v235 = vld [vmem:[%s7 + $0x8] sm:$0xf]
    %v236 = vld [vmem:[%s7 + $0xc] sm:$0xf]
    %v241 = vunpack.c.l.b16 %v233
    %v242 = vunpack.c.l.b16 %v234
    %v243 = vunpack.c.l.b16 %v235
    %v244 = vunpack.c.l.b16 %v236
    %v245 = vpack.c.b16 %v242, %v241
    %v246 = vpack.c.b16 %v244, %v243
    %v250 = vsel %vm136, %v232, 0
    %252 = vmatpush.bf16.msra.mxu0 0
    %253 = vmatpush.bf16.msra.mxu0 0
    %254 = vmatpush.bf16.msra.mxu0 0
    %255 = vmatpush.bf16.msra.mxu0 0
    %256 = vmatpush.bf16.msra.mxu0 0
    %257 = vmatpush.bf16.msra.mxu0 0
    %258 = vmatpush.bf16.msra.mxu0 %v246
    %259 = vmatpush.bf16.msra.mxu0 %v245
    %260 = vmatmul.bf16.gmra.mxu0 %v250
    %v261 = vpop.f32.mrf.mxu0
    %v262 = vadd.f32 0.0, %v261
    %v263 = vpop.f32.mrf.mxu0
    %v264 = vadd.f32 0.0, %v263
    %265 = vdwg.mxu0
    %268 = vrot.lane.b32.xlu0 %v262, 120
    %v269 = vpop.permute.xlu0 %268
    %270 = vrot.lane.b32.xlu0 %v264, 120
    %v271 = vpop.permute.xlu0 %270
    %274 = vrot.lane.b32.xlu0 %v262, 112
    %v275 = vpop.permute.xlu0 %274
    %276 = vrot.lane.b32.xlu0 %v264, 112
    %v277 = vpop.permute.xlu0 %276
    %280 = vrot.lane.b32.xlu0 %v262, 104
    %v281 = vpop.permute.xlu0 %280
    %282 = vrot.lane.b32.xlu0 %v264, 104
    %v283 = vpop.permute.xlu0 %282
    %v286 = vpack.c.bf16 %v262, %v262
    %v287 = vpack.c.bf16 %v264, %v264
    %v288 = vpack.c.bf16 %v269, %v269
    %v289 = vpack.c.bf16 %v271, %v271
    %v290 = vpack.c.bf16 %v275, %v275
    %v291 = vpack.c.bf16 %v277, %v277
    %v292 = vpack.c.bf16 %v281, %v281
    %v293 = vpack.c.bf16 %v283, %v283
    %v296 = vunpack.c.l.b16 %v286
    %v297 = vunpack.c.l.b16 %v287
    %v298 = vpack.c.b16 %v297, %v296
    %299 = vrot.lane.b32.xlu0 %v298, 96
    %v300 = vpop.permute.xlu0 %299
    %vm301 = vcmask 64512
    %v303 = vsel %vm301, %v298, 0
    %v306 = vsel %vm301, %v300, 0
    %308 = vmatpush.bf16.xpose.msra.mxu0 0
    %309 = vmatpush.bf16.xpose.msra.mxu0 0
    %310 = vmatpush.bf16.xpose.msra.mxu0 0
    %311 = vmatpush.bf16.xpose.msra.mxu0 0
    %312 = vmatpush.bf16.xpose.msra.mxu0 0
    %313 = vmatpush.bf16.xpose.msra.mxu0 0
    %314 = vmatpush.bf16.xpose.msra.mxu0 0
    %315 = vmatpush.bf16.xpose.msra.mxu0 %v306
    %316 = vmatmul.bf16.gmra.mxu0 %v303
    %v317 = vpop.f32.mrf.mxu0
    %v318 = vadd.f32 %v128, %v317
    %v319 = vpop.f32.mrf.mxu0
    %v320 = vadd.f32 %v129, %v319
    %321 = vdwg.mxu0
    %v324 = vunpack.c.l.b16 %v288
    %v325 = vunpack.c.l.b16 %v289
    %v326 = vpack.c.b16 %v325, %v324
    %327 = vrot.lane.b32.xlu0 %v326, 96
    %v328 = vpop.permute.xlu0 %327
    %v330 = vsel %vm301, %v326, 0
    %v333 = vsel %vm301, %v328, 0
    %335 = vmatpush.bf16.xpose.msra.mxu0 0
    %336 = vmatpush.bf16.xpose.msra.mxu0 0
    %337 = vmatpush.bf16.xpose.msra.mxu0 0
    %338 = vmatpush.bf16.xpose.msra.mxu0 0
    %339 = vmatpush.bf16.xpose.msra.mxu0 0
    %340 = vmatpush.bf16.xpose.msra.mxu0 0
    %341 = vmatpush.bf16.xpose.msra.mxu0 0
    %342 = vmatpush.bf16.xpose.msra.mxu0 %v333
    %343 = vmatmul.bf16.gmra.mxu0 %v330
    %v344 = vpop.f32.mrf.mxu0
    %v345 = vadd.f32 %v128, %v344
    %v346 = vpop.f32.mrf.mxu0
    %v347 = vadd.f32 %v129, %v346
    %348 = vdwg.mxu0
    %v351 = vunpack.c.l.b16 %v290
    %v352 = vunpack.c.l.b16 %v291
    %v353 = vpack.c.b16 %v352, %v351
    %354 = vrot.lane.b32.xlu0 %v353, 96
    %v355 = vpop.permute.xlu0 %354
    %v357 = vsel %vm301, %v353, 0
    %v360 = vsel %vm301, %v355, 0
    %362 = vmatpush.bf16.xpose.msra.mxu0 0
    %363 = vmatpush.bf16.xpose.msra.mxu0 0
    %364 = vmatpush.bf16.xpose.msra.mxu0 0
    %365 = vmatpush.bf16.xpose.msra.mxu0 0
    %366 = vmatpush.bf16.xpose.msra.mxu0 0
    %367 = vmatpush.bf16.xpose.msra.mxu0 0
    %368 = vmatpush.bf16.xpose.msra.mxu0 0
    %369 = vmatpush.bf16.xpose.msra.mxu0 %v360
    %370 = vmatmul.bf16.gmra.mxu0 %v357
    %v371 = vpop.f32.mrf.mxu0
    %v372 = vadd.f32 %v128, %v371
    %v373 = vpop.f32.mrf.mxu0
    %v374 = vadd.f32 %v129, %v373
    %375 = vdwg.mxu0
    %v378 = vunpack.c.l.b16 %v292
    %v379 = vunpack.c.l.b16 %v293
    %v380 = vpack.c.b16 %v379, %v378
    %381 = vrot.lane.b32.xlu0 %v380, 96
    %v382 = vpop.permute.xlu0 %381
    %v384 = vsel %vm301, %v380, 0
    %v387 = vsel %vm301, %v382, 0
    %389 = vmatpush.bf16.xpose.msra.mxu0 0
    %390 = vmatpush.bf16.xpose.msra.mxu0 0
    %391 = vmatpush.bf16.xpose.msra.mxu0 0
    %392 = vmatpush.bf16.xpose.msra.mxu0 0
    %393 = vmatpush.bf16.xpose.msra.mxu0 0
    %394 = vmatpush.bf16.xpose.msra.mxu0 0
    %395 = vmatpush.bf16.xpose.msra.mxu0 0
    %396 = vmatpush.bf16.xpose.msra.mxu0 %v387
    %397 = vmatmul.bf16.gmra.mxu0 %v384
    %v398 = vpop.f32.mrf.mxu0
    %v399 = vadd.f32 %v128, %v398
    %v400 = vpop.f32.mrf.mxu0
    %v401 = vadd.f32 %v129, %v400
    %402 = vdwg.mxu0
    %vm403 = vcmask 130048
    %v404 = vsel %vm403, %v318, -inf
    %405 = vmax.xlane.f32.xlu0 %v404
    %v406 = vpop.xlane.xlu0 %405
    %v407 = vsel %vm403, %v320, -inf
    %408 = vmax.xlane.f32.xlu0 %v407
    %v409 = vpop.xlane.xlu0 %408
    %v410 = vsel %vm403, %v345, -inf
    %411 = vmax.xlane.f32.xlu0 %v410
    %v412 = vpop.xlane.xlu0 %411
    %v413 = vsel %vm403, %v347, -inf
    %414 = vmax.xlane.f32.xlu0 %v413
    %v415 = vpop.xlane.xlu0 %414
    %v416 = vsel %vm403, %v372, -inf
    %417 = vmax.xlane.f32.xlu0 %v416
    %v418 = vpop.xlane.xlu0 %417
    %v419 = vsel %vm403, %v374, -inf
    %420 = vmax.xlane.f32.xlu0 %v419
    %v421 = vpop.xlane.xlu0 %420
    %v422 = vsel %vm403, %v399, -inf
    %423 = vmax.xlane.f32.xlu0 %v422
    %v424 = vpop.xlane.xlu0 %423
    %v425 = vsel %vm403, %v401, -inf
    %426 = vmax.xlane.f32.xlu0 %v425
    %v427 = vpop.xlane.xlu0 %426
    %v428 = vsub.f32 %v318, %v406
    %v429 = vsub.f32 %v320, %v409
    %v430 = vsub.f32 %v345, %v412
    %v431 = vsub.f32 %v347, %v415
    %v432 = vsub.f32 %v372, %v418
    %v433 = vsub.f32 %v374, %v421
    %v434 = vsub.f32 %v399, %v424
    %v435 = vsub.f32 %v401, %v427
    %v436 = vmul.f32 %v428, 1.442695
    %v437 = vpow.pop %v436
    %v438 = vmul.f32 %v429, 1.442695
    %v439 = vpow.pop %v438
    %v440 = vmul.f32 %v430, 1.442695
    %v441 = vpow.pop %v440
    %v442 = vmul.f32 %v431, 1.442695
    %v443 = vpow.pop %v442
    %v444 = vmul.f32 %v432, 1.442695
    %v445 = vpow.pop %v444
    %v446 = vmul.f32 %v433, 1.442695
    %v447 = vpow.pop %v446
    %v448 = vmul.f32 %v434, 1.442695
    %v449 = vpow.pop %v448
    %v450 = vmul.f32 %v435, 1.442695
    %v451 = vpow.pop %v450
    %v452 = vsel %vm403, %v437, 0.0
    %453 = vadd.xlane.f32.xlu0 %v452
    %v454 = vpop.xlane.xlu0 %453
    %v455 = vsel %vm403, %v439, 0.0
    %456 = vadd.xlane.f32.xlu0 %v455
    %v457 = vpop.xlane.xlu0 %456
    %v458 = vsel %vm403, %v441, 0.0
    %459 = vadd.xlane.f32.xlu0 %v458
    %v460 = vpop.xlane.xlu0 %459
    %v461 = vsel %vm403, %v443, 0.0
    %462 = vadd.xlane.f32.xlu0 %v461
    %v463 = vpop.xlane.xlu0 %462
    %v464 = vsel %vm403, %v445, 0.0
    %465 = vadd.xlane.f32.xlu0 %v464
    %v466 = vpop.xlane.xlu0 %465
    %v467 = vsel %vm403, %v447, 0.0
    %468 = vadd.xlane.f32.xlu0 %v467
    %v469 = vpop.xlane.xlu0 %468
    %v470 = vsel %vm403, %v449, 0.0
    %471 = vadd.xlane.f32.xlu0 %v470
    %v472 = vpop.xlane.xlu0 %471
    %v473 = vsel %vm403, %v451, 0.0
    %474 = vadd.xlane.f32.xlu0 %v473
    %v475 = vpop.xlane.xlu0 %474
    %v476 = vrcp.pop %v454
    %v477 = vrcp.pop %v457
    %v478 = vrcp.pop %v460
    %v479 = vrcp.pop %v463
    %v480 = vrcp.pop %v466
    %v481 = vrcp.pop %v469
    %v482 = vrcp.pop %v472
    %v483 = vrcp.pop %v475
    %v484 = vmul.f32 %v437, %v476
    %v485 = vmul.f32 %v439, %v477
    %v486 = vmul.f32 %v441, %v478
    %v487 = vmul.f32 %v443, %v479
    %v488 = vmul.f32 %v445, %v480
    %v489 = vmul.f32 %v447, %v481
    %v490 = vmul.f32 %v449, %v482
    %v491 = vmul.f32 %v451, %v483
    %v492 = vpack.c.bf16 %v484, %v484
    %v493 = vpack.c.bf16 %v485, %v485
    %v494 = vpack.c.bf16 %v486, %v486
    %v495 = vpack.c.bf16 %v487, %v487
    %v496 = vpack.c.bf16 %v488, %v488
    %v497 = vpack.c.bf16 %v489, %v489
    %v498 = vpack.c.bf16 %v490, %v490
    %v499 = vpack.c.bf16 %v491, %v491
    %v502 = vunpack.c.l.b16 %v492
    %v503 = vunpack.c.l.b16 %v493
    %v504 = vpack.c.b16 %v503, %v502
    %505 = vrot.lane.b32.xlu0 %v298, 64
    %v506 = vpop.permute.xlu0 %505
    %v509 = vsel %vm403, %v504, 0
    %511 = vmatpush.bf16.msra.mxu0 0
    %512 = vmatpush.bf16.msra.mxu0 0
    %513 = vmatpush.bf16.msra.mxu0 0
    %514 = vmatpush.bf16.msra.mxu0 0
    %515 = vmatpush.bf16.msra.mxu0 0
    %516 = vmatpush.bf16.msra.mxu0 0
    %517 = vmatpush.bf16.msra.mxu0 0
    %518 = vmatpush.bf16.msra.mxu0 %v506
    %519 = vmatmul.bf16.gmra.mxu0 %v509
    %v520 = vpop.f32.mrf.mxu0
    %v521 = vadd.f32 0.0, %v520
    %v522 = vpop.f32.mrf.mxu0
    %v523 = vadd.f32 0.0, %v522
    %524 = vdwg.mxu0
    %v527 = vunpack.c.l.b16 %v494
    %v528 = vunpack.c.l.b16 %v495
    %v529 = vpack.c.b16 %v528, %v527
    %530 = vrot.lane.b32.xlu0 %v326, 64
    %v531 = vpop.permute.xlu0 %530
    %v534 = vsel %vm403, %v529, 0
    %536 = vmatpush.bf16.msra.mxu0 0
    %537 = vmatpush.bf16.msra.mxu0 0
    %538 = vmatpush.bf16.msra.mxu0 0
    %539 = vmatpush.bf16.msra.mxu0 0
    %540 = vmatpush.bf16.msra.mxu0 0
    %541 = vmatpush.bf16.msra.mxu0 0
    %542 = vmatpush.bf16.msra.mxu0 0
    %543 = vmatpush.bf16.msra.mxu0 %v531
    %544 = vmatmul.bf16.gmra.mxu0 %v534
    %v545 = vpop.f32.mrf.mxu0
    %v546 = vadd.f32 0.0, %v545
    %v547 = vpop.f32.mrf.mxu0
    %v548 = vadd.f32 0.0, %v547
    %549 = vdwg.mxu0
    %v552 = vunpack.c.l.b16 %v496
    %v553 = vunpack.c.l.b16 %v497
    %v554 = vpack.c.b16 %v553, %v552
    %555 = vrot.lane.b32.xlu0 %v353, 64
    %v556 = vpop.permute.xlu0 %555
    %v559 = vsel %vm403, %v554, 0
    %561 = vmatpush.bf16.msra.mxu0 0
    %562 = vmatpush.bf16.msra.mxu0 0
    %563 = vmatpush.bf16.msra.mxu0 0
    %564 = vmatpush.bf16.msra.mxu0 0
    %565 = vmatpush.bf16.msra.mxu0 0
    %566 = vmatpush.bf16.msra.mxu0 0
    %567 = vmatpush.bf16.msra.mxu0 0
    %568 = vmatpush.bf16.msra.mxu0 %v556
    %569 = vmatmul.bf16.gmra.mxu0 %v559
    %v570 = vpop.f32.mrf.mxu0
    %v571 = vadd.f32 0.0, %v570
    %v572 = vpop.f32.mrf.mxu0
    %v573 = vadd.f32 0.0, %v572
    %574 = vdwg.mxu0
    %v577 = vunpack.c.l.b16 %v498
    %v578 = vunpack.c.l.b16 %v499
    %v579 = vpack.c.b16 %v578, %v577
    %580 = vrot.lane.b32.xlu0 %v380, 64
    %v581 = vpop.permute.xlu0 %580
    %v584 = vsel %vm403, %v579, 0
    %586 = vmatpush.bf16.msra.mxu0 0
    %587 = vmatpush.bf16.msra.mxu0 0
    %588 = vmatpush.bf16.msra.mxu0 0
    %589 = vmatpush.bf16.msra.mxu0 0
    %590 = vmatpush.bf16.msra.mxu0 0
    %591 = vmatpush.bf16.msra.mxu0 0
    %592 = vmatpush.bf16.msra.mxu0 0
    %593 = vmatpush.bf16.msra.mxu0 %v581
    %594 = vmatmul.bf16.gmra.mxu0 %v584
    %v595 = vpop.f32.mrf.mxu0
    %v596 = vadd.f32 0.0, %v595
    %v597 = vpop.f32.mrf.mxu0
    %v598 = vadd.f32 0.0, %v597
    %599 = vdwg.mxu0
    %602 = vrot.lane.b32.xlu0 %v546, 8
    %v603 = vpop.permute.xlu0 %602
    %604 = vrot.lane.b32.xlu0 %v548, 8
    %v605 = vpop.permute.xlu0 %604
    %610 = vrot.lane.b32.xlu0 %v571, 16
    %v611 = vpop.permute.xlu0 %610
    %612 = vrot.lane.b32.xlu0 %v573, 16
    %v613 = vpop.permute.xlu0 %612
    %618 = vrot.lane.b32.xlu0 %v596, 24
    %v619 = vpop.permute.xlu0 %618
    %620 = vrot.lane.b32.xlu0 %v598, 24
    %v621 = vpop.permute.xlu0 %620
    %v624 = vsel %vm301, %v521, %v603
    %v625 = vsel %vm301, %v523, %v605
    %v626 = vsel %vm403, %v624, %v611
    %v627 = vsel %vm403, %v625, %v613
    %vm628 = vcmask 195584
    %v629 = vsel %vm628, %v626, %v619
    %v630 = vsel %vm628, %v627, %v621
    %v631 = vpack.c.bf16 %v630, %v629
    %v632 = vld [vmem:[%s8] sm:$0xf]
    %v633 = vld [vmem:[%s8 + $0x4] sm:$0xf]
    %v634 = vld [vmem:[%s8 + $0x8] sm:$0xf]
    %v635 = vld [vmem:[%s8 + $0xc] sm:$0xf]
    %v640 = vunpack.c.l.b16 %v632
    %v641 = vunpack.c.l.b16 %v633
    %v642 = vunpack.c.l.b16 %v634
    %v643 = vunpack.c.l.b16 %v635
    %v644 = vpack.c.b16 %v641, %v640
    %v645 = vpack.c.b16 %v643, %v642
    %v649 = vsel %vm136, %v631, 0
    %651 = vmatpush.bf16.msra.mxu0 0
    %652 = vmatpush.bf16.msra.mxu0 0
    %653 = vmatpush.bf16.msra.mxu0 0
    %654 = vmatpush.bf16.msra.mxu0 0
    %655 = vmatpush.bf16.msra.mxu0 0
    %656 = vmatpush.bf16.msra.mxu0 0
    %657 = vmatpush.bf16.msra.mxu0 %v645
    %658 = vmatpush.bf16.msra.mxu0 %v644
    %659 = vmatmul.bf16.gmra.mxu0 %v649
    %v660 = vpop.f32.mrf.mxu0
    %v661 = vadd.f32 0.0, %v660
    %v662 = vpop.f32.mrf.mxu0
    %v663 = vadd.f32 0.0, %v662
    %664 = vdwg.mxu0
    %v665 = vadd.f32 %v106, %v661
    %v666 = vadd.f32 %v108, %v663
    %v667 = vld [vmem:[%s15] sm:$0x1]
    %v668 = vld [vmem:[%s16] sm:$0x1]
    %v669 = vsel %vm136, %v665, 0.0
    %670 = vadd.xlane.f32.xlu0 %v669
    %v671 = vpop.xlane.xlu0 %670
    %v672 = vsel %vm136, %v666, 0.0
    %673 = vadd.xlane.f32.xlu0 %v672
    %v674 = vpop.xlane.xlu0 %673
    %v675 = vmul.f32 %v671, %v149
    %v676 = vmul.f32 %v674, %v149
    %v677 = vsub.f32 %v665, %v675
    %v678 = vsub.f32 %v666, %v676
    %v679 = vmul.f32 %v677, %v677
    %v680 = vmul.f32 %v678, %v678
    %v681 = vsel %vm136, %v679, 0.0
    %682 = vadd.xlane.f32.xlu0 %v681
    %v683 = vpop.xlane.xlu0 %682
    %v684 = vsel %vm136, %v680, 0.0
    %685 = vadd.xlane.f32.xlu0 %v684
    %v686 = vpop.xlane.xlu0 %685
    %v687 = vmul.f32 %v683, 0.032258064
    %v688 = vmul.f32 %v686, 0.032258064
    %v689 = vrsqrt.pop %v687
    %v690 = vmul.f32 %v689, %v687
    %v691 = vmul.f32 %v690, %v689
    %v692 = vmul.f32 0.5, %v691
    %v693 = vsub.f32 1.5, %v692
    %v694 = vmul.f32 %v689, %v693
    %v695 = vmul.f32 %v687, %v694
    %vm696 = vcmp.eq.f32.partialorder %v687, inf
    %v697 = vsel %vm696, %v687, %v695
    %vm698 = vcmp.eq.f32.partialorder %v687, 0.0
    %v699 = vand.u32 %v687, 2147483648
    %v700 = vsel %vm698, %v699, %v697
    %v701 = vrsqrt.pop %v688
    %v702 = vmul.f32 %v701, %v688
    %v703 = vmul.f32 %v702, %v701
    %v704 = vmul.f32 0.5, %v703
    %v705 = vsub.f32 1.5, %v704
    %v706 = vmul.f32 %v701, %v705
    %v707 = vmul.f32 %v688, %v706
    %vm708 = vcmp.eq.f32.partialorder %v688, inf
    %v709 = vsel %vm708, %v688, %v707
    %vm710 = vcmp.eq.f32.partialorder %v688, 0.0
    %v711 = vand.u32 %v688, 2147483648
    %v712 = vsel %vm710, %v711, %v709
    %v713 = vadd.f32 %v700, 1e-06
    %v714 = vadd.f32 %v712, 1e-06
    %v715 = vrcp.pop %v713
    %v716 = vmul.f32 %v713, %v715
    %v717 = vsub.f32 1.0, %v716
    %v718 = vmul.f32 %v715, %v717
    %v719 = vadd.f32 %v715, %v718
    %vm720 = vweird.f32 %v713
    %vm721 = vweird.f32 %v715
    %vm722 = vmor %vm720, %vm721
    %v723 = vsel %vm722, %v715, %v719
    %v724 = vand.u32 2147483647, %v713
    %vm725 = vcmp.eq.f32.partialorder %v724, 8.507059e+37
    %v726 = vand.u32 %v713, 2147483648
    %v727 = vor.u32 1.1754944e-38, %v726
    %v728 = vsel %vm725, %v727, %v723
    %v729 = vmul.f32 1.0, %v728
    %v730 = vrcp.pop %v714
    %v731 = vmul.f32 %v714, %v730
    %v732 = vsub.f32 1.0, %v731
    %v733 = vmul.f32 %v730, %v732
    %v734 = vadd.f32 %v730, %v733
    %vm735 = vweird.f32 %v714
    %vm736 = vweird.f32 %v730
    %vm737 = vmor %vm735, %vm736
    %v738 = vsel %vm737, %v730, %v734
    %v739 = vand.u32 2147483647, %v714
    %vm740 = vcmp.eq.f32.partialorder %v739, 8.507059e+37
    %v741 = vand.u32 %v714, 2147483648
    %v742 = vor.u32 1.1754944e-38, %v741
    %v743 = vsel %vm740, %v742, %v738
    %v744 = vmul.f32 1.0, %v743
    %v746 = vperm.slane %v667, 0
    %v748 = vmul.f32 %v746, %v677
    %v749 = vmul.f32 %v746, %v678
    %v750 = vmul.f32 %v748, %v729
    %v751 = vmul.f32 %v749, %v744
    %v753 = vperm.slane %v668, 0
    %v755 = vadd.f32 %v750, %v753
    %v756 = vadd.f32 %v751, %v753
    %v757 = vrot.slane %v755, 7
    %v758 = vrot.slane %v756, 7
    %v759 = vlaneseq
    %v760 = vshrl.u32 %v759, 7
    %vm761 = vcmp.lt.s32.totalorder %v760, 1
    %v762 = vsel %vm761, %v757, %v758
    %v763 = vsel %vm761, %v758, %v757
    %765 = vset.pattern.permute.xlu0 0
    %766 = vperm.xlu0 %765, %v130
    %v767 = vpop.permute.xlu0 %766
    %770 = vset.pattern.permute.xlu0 0
    %771 = vperm.xlu0 %770, %v131
    %v772 = vpop.permute.xlu0 %771
    %v774 = vmul.f32 %v763, %v767
    %v775 = vmul.f32 %v762, %v772
    %v776 = vrot.slane %v755, 1
    %v777 = vrot.slane %v756, 1
    %vm778 = vcmp.lt.s32.totalorder %v760, 7
    %v779 = vsel %vm778, %v776, %v777
    %v780 = vsel %vm778, %v777, %v776
    %782 = vset.pattern.permute.xlu0 0
    %783 = vperm.xlu0 %782, %v132
    %v784 = vpop.permute.xlu0 %783
    %787 = vset.pattern.permute.xlu0 0
    %788 = vperm.xlu0 %787, %v133
    %v789 = vpop.permute.xlu0 %788
    %v791 = vmul.f32 %v779, %v784
    %v792 = vmul.f32 %v780, %v789
    %795 = vrot.lane.b32.xlu0 %v755, 32
    %v796 = vpop.permute.xlu0 %795
    %797 = vrot.lane.b32.xlu0 %v756, 32
    %v798 = vpop.permute.xlu0 %797
    %803 = vrot.lane.b32.xlu0 %v791, 64
    %v804 = vpop.permute.xlu0 %803
    %805 = vrot.lane.b32.xlu0 %v792, 64
    %v806 = vpop.permute.xlu0 %805
    %v809 = vsel %vm136, %v774, %v796
    %v810 = vsel %vm136, %v775, %v798
    %vm811 = vcmask 523264
    %v812 = vsel %vm811, %v809, %v804
    %v813 = vsel %vm811, %v810, %v806
    %v814 = vpack.c.bf16 %v813, %v812
    %v815 = vld [vmem:[%s9] sm:$0xf]
    %v816 = vld [vmem:[%s9 + $0x4] sm:$0xf]
    %v817 = vld [vmem:[%s9 + $0x8] sm:$0xf]
    %v818 = vld [vmem:[%s9 + $0xc] sm:$0xf]
    %v819 = vld [vmem:[%s9 + $0x10] sm:$0xf]
    %v820 = vld [vmem:[%s9 + $0x14] sm:$0xf]
    %v821 = vld [vmem:[%s9 + $0x18] sm:$0xf]
    %v822 = vld [vmem:[%s9 + $0x1c] sm:$0xf]
    %v823 = vld [vmem:[%s9 + $0x20] sm:$0xf]
    %v824 = vld [vmem:[%s9 + $0x24] sm:$0xf]
    %v825 = vld [vmem:[%s9 + $0x28] sm:$0xf]
    %v826 = vld [vmem:[%s9 + $0x2c] sm:$0xf]
    %v827 = vld [vmem:[%s10] sm:$0x1]
    %v829 = vperm.slane %v827, 0
    %v843 = vunpack.c.l.b16 %v815
    %v844 = vunpack.c.l.b16 %v816
    %v845 = vunpack.c.l.b16 %v817
    %v846 = vunpack.c.l.b16 %v818
    %v847 = vunpack.c.l.b16 %v819
    %v848 = vunpack.c.l.b16 %v820
    %v849 = vunpack.c.l.b16 %v821
    %v850 = vunpack.c.l.b16 %v822
    %v851 = vunpack.c.l.b16 %v823
    %v852 = vunpack.c.l.b16 %v824
    %v853 = vunpack.c.l.b16 %v825
    %v854 = vunpack.c.l.b16 %v826
    %v855 = vpack.c.b16 %v844, %v843
    %v856 = vpack.c.b16 %v846, %v845
    %v857 = vpack.c.b16 %v848, %v847
    %v858 = vpack.c.b16 %v850, %v849
    %v859 = vpack.c.b16 %v852, %v851
    %v860 = vpack.c.b16 %v854, %v853
    %vm867 = vcmask 785408
    %v869 = vsel %vm867, %v814, 0
    %871 = vmatpush.bf16.msra.mxu0 0
    %872 = vmatpush.bf16.msra.mxu0 0
    %873 = vmatpush.bf16.msra.mxu0 %v860
    %874 = vmatpush.bf16.msra.mxu0 %v859
    %875 = vmatpush.bf16.msra.mxu0 %v858
    %876 = vmatpush.bf16.msra.mxu0 %v857
    %877 = vmatpush.bf16.msra.mxu0 %v856
    %878 = vmatpush.bf16.msra.mxu0 %v855
    %879 = vmatmul.bf16.gmra.mxu0 %v869
    %v880 = vpop.f32.mrf.mxu0
    %v881 = vadd.f32 %v829, %v880
    %v882 = vpop.f32.mrf.mxu0
    %v883 = vadd.f32 %v829, %v882
    %884 = vdwg.mxu0
    %v885 = vmax.f32 %v881, 0.0
    %v886 = vmax.f32 %v883, 0.0
    %v887 = vrot.slane %v885, 7
    %v888 = vrot.slane %v886, 7
    %v889 = vsel %vm761, %v887, %v888
    %v890 = vsel %vm761, %v888, %v887
    %v891 = vmul.f32 %v890, %v767
    %v892 = vmul.f32 %v889, %v772
    %v893 = vrot.slane %v885, 1
    %v894 = vrot.slane %v886, 1
    %v895 = vsel %vm778, %v893, %v894
    %v896 = vsel %vm778, %v894, %v893
    %v897 = vmul.f32 %v895, %v784
    %v898 = vmul.f32 %v896, %v789
    %901 = vrot.lane.b32.xlu0 %v885, 64
    %v902 = vpop.permute.xlu0 %901
    %903 = vrot.lane.b32.xlu0 %v886, 64
    %v904 = vpop.permute.xlu0 %903
    %v907 = vsel %vm811, %v891, %v902
    %v908 = vsel %vm811, %v892, %v904
    %v909 = vpack.c.bf16 %v908, %v907
    %v910 = vpack.c.bf16 %v898, %v897
    %v911 = vld [vmem:[%s11] sm:$0xf]
    %v912 = vld [vmem:[%s11 + $0x4] sm:$0xf]
    %v913 = vld [vmem:[%s11 + $0x8] sm:$0xf]
    %v914 = vld [vmem:[%s11 + $0xc] sm:$0xf]
    %v915 = vld [vmem:[%s11 + $0x10] sm:$0xf]
    %v916 = vld [vmem:[%s11 + $0x14] sm:$0xf]
    %v917 = vld [vmem:[%s11 + $0x18] sm:$0xf]
    %v918 = vld [vmem:[%s11 + $0x1c] sm:$0xf]
    %v919 = vld [vmem:[%s11 + $0x20] sm:$0xf]
    %v920 = vld [vmem:[%s11 + $0x24] sm:$0xf]
    %v921 = vld [vmem:[%s11 + $0x28] sm:$0xf]
    %v922 = vld [vmem:[%s11 + $0x2c] sm:$0xf]
    %v923 = vld [vmem:[%s11 + $0x30] sm:$0xf]
    %v924 = vld [vmem:[%s11 + $0x34] sm:$0xf]
    %v925 = vld [vmem:[%s11 + $0x38] sm:$0xf]
    %v926 = vld [vmem:[%s11 + $0x3c] sm:$0xf]
    %v927 = vld [vmem:[%s11 + $0x40] sm:$0xf]
    %v928 = vld [vmem:[%s11 + $0x44] sm:$0xf]
    %v929 = vld [vmem:[%s11 + $0x48] sm:$0xf]
    %v930 = vld [vmem:[%s11 + $0x4c] sm:$0xf]
    %v931 = vld [vmem:[%s11 + $0x50] sm:$0xf]
    %v932 = vld [vmem:[%s11 + $0x54] sm:$0xf]
    %v933 = vld [vmem:[%s11 + $0x58] sm:$0xf]
    %v934 = vld [vmem:[%s11 + $0x5c] sm:$0xf]
    %v935 = vld [vmem:[%s12] sm:$0x1]
    %v937 = vperm.slane %v935, 0
    %v963 = vunpack.c.l.b16 %v911
    %v964 = vunpack.c.l.b16 %v912
    %v965 = vunpack.c.l.b16 %v913
    %v966 = vunpack.c.l.b16 %v914
    %v967 = vunpack.c.l.b16 %v915
    %v968 = vunpack.c.l.b16 %v916
    %v969 = vunpack.c.l.b16 %v917
    %v970 = vunpack.c.l.b16 %v918
    %v971 = vunpack.c.l.b16 %v919
    %v972 = vunpack.c.l.b16 %v920
    %v973 = vunpack.c.l.b16 %v921
    %v974 = vunpack.c.l.b16 %v922
    %v975 = vunpack.c.l.b16 %v923
    %v976 = vunpack.c.l.b16 %v924
    %v977 = vunpack.c.l.b16 %v925
    %v978 = vunpack.c.l.b16 %v926
    %v979 = vunpack.c.l.b16 %v927
    %v980 = vunpack.c.l.b16 %v928
    %v981 = vunpack.c.l.b16 %v929
    %v982 = vunpack.c.l.b16 %v930
    %v983 = vunpack.c.l.b16 %v931
    %v984 = vunpack.c.l.b16 %v932
    %v985 = vunpack.c.l.b16 %v933
    %v986 = vunpack.c.l.b16 %v934
    %v987 = vpack.c.b16 %v964, %v963
    %v988 = vpack.c.b16 %v966, %v965
    %v989 = vpack.c.b16 %v968, %v967
    %v990 = vpack.c.b16 %v970, %v969
    %v991 = vpack.c.b16 %v972, %v971
    %v992 = vpack.c.b16 %v974, %v973
    %v993 = vpack.c.b16 %v976, %v975
    %v994 = vpack.c.b16 %v978, %v977
    %v995 = vpack.c.b16 %v980, %v979
    %v996 = vpack.c.b16 %v982, %v981
    %v997 = vpack.c.b16 %v984, %v983
    %v998 = vpack.c.b16 %v986, %v985
    %v1012 = vsel %vm811, %v910, 0
    %1014 = vmatpush.bf16.msra.mxu0 %v994
    %1015 = vmatpush.bf16.msra.mxu0 %v993
    %1016 = vmatpush.bf16.msra.mxu0 %v992
    %1017 = vmatpush.bf16.msra.mxu0 %v991
    %1018 = vmatpush.bf16.msra.mxu0 %v990
    %1019 = vmatpush.bf16.msra.mxu0 %v989
    %1020 = vmatpush.bf16.msra.mxu0 %v988
    %1021 = vmatpush.bf16.msra.mxu0 %v987
    %1022 = vmatmul.bf16.gmra.mxu0 %v909
    %v1023 = vpop.f32.mrf.mxu0
    %v1024 = vadd.f32 %v937, %v1023
    %v1025 = vpop.f32.mrf.mxu0
    %v1026 = vadd.f32 %v937, %v1025
    %1027 = vdwg.mxu0
    %1028 = vmatpush.bf16.msra.mxu0 0
    %1029 = vmatpush.bf16.msra.mxu0 0
    %1030 = vmatpush.bf16.msra.mxu0 0
    %1031 = vmatpush.bf16.msra.mxu0 0
    %1032 = vmatpush.bf16.msra.mxu0 %v998
    %1033 = vmatpush.bf16.msra.mxu0 %v997
    %1034 = vmatpush.bf16.msra.mxu0 %v996
    %1035 = vmatpush.bf16.msra.mxu0 %v995
    %1036 = vmatmul.bf16.gmra.mxu0 %v1012
    %v1037 = vpop.f32.mrf.mxu0
    %v1038 = vadd.f32 %v1024, %v1037
    %v1039 = vpop.f32.mrf.mxu0
    %v1040 = vadd.f32 %v1026, %v1039
    %1041 = vdwg.mxu0
    %v1042 = vmax.f32 %v1038, 0.0
    %v1043 = vmax.f32 %v1040, 0.0
    %v1044 = vadd.f32 %v665, %v1042
    %v1045 = vadd.f32 %v666, %v1043
    %s1046 = scalar_lea.vmem %s13, 1
    %v1047 = vld [vmem:[%s1046] sm:$0x1]
    %s1048 = scalar_lea.vmem %s14, 1
    %v1049 = vld [vmem:[%s1048] sm:$0x1]
    %v1050 = vsel %vm136, %v1044, 0.0
    %1051 = vadd.xlane.f32.xlu0 %v1050
    %v1052 = vpop.xlane.xlu0 %1051
    %v1053 = vsel %vm136, %v1045, 0.0
    %1054 = vadd.xlane.f32.xlu0 %v1053
    %v1055 = vpop.xlane.xlu0 %1054
    %v1056 = vmul.f32 %v1052, %v149
    %v1057 = vmul.f32 %v1055, %v149
    %v1058 = vsub.f32 %v1044, %v1056
    %v1059 = vsub.f32 %v1045, %v1057
    %v1060 = vmul.f32 %v1058, %v1058
    %v1061 = vmul.f32 %v1059, %v1059
    %v1062 = vsel %vm136, %v1060, 0.0
    %1063 = vadd.xlane.f32.xlu0 %v1062
    %v1064 = vpop.xlane.xlu0 %1063
    %v1065 = vsel %vm136, %v1061, 0.0
    %1066 = vadd.xlane.f32.xlu0 %v1065
    %v1067 = vpop.xlane.xlu0 %1066
    %v1068 = vmul.f32 %v1064, 0.032258064
    %v1069 = vmul.f32 %v1067, 0.032258064
    %v1070 = vrsqrt.pop %v1068
    %v1071 = vmul.f32 %v1070, %v1068
    %v1072 = vmul.f32 %v1071, %v1070
    %v1073 = vmul.f32 0.5, %v1072
    %v1074 = vsub.f32 1.5, %v1073
    %v1075 = vmul.f32 %v1070, %v1074
    %v1076 = vmul.f32 %v1068, %v1075
    %vm1077 = vcmp.eq.f32.partialorder %v1068, inf
    %v1078 = vsel %vm1077, %v1068, %v1076
    %vm1079 = vcmp.eq.f32.partialorder %v1068, 0.0
    %v1080 = vand.u32 %v1068, 2147483648
    %v1081 = vsel %vm1079, %v1080, %v1078
    %v1082 = vrsqrt.pop %v1069
    %v1083 = vmul.f32 %v1082, %v1069
    %v1084 = vmul.f32 %v1083, %v1082
    %v1085 = vmul.f32 0.5, %v1084
    %v1086 = vsub.f32 1.5, %v1085
    %v1087 = vmul.f32 %v1082, %v1086
    %v1088 = vmul.f32 %v1069, %v1087
    %vm1089 = vcmp.eq.f32.partialorder %v1069, inf
    %v1090 = vsel %vm1089, %v1069, %v1088
    %vm1091 = vcmp.eq.f32.partialorder %v1069, 0.0
    %v1092 = vand.u32 %v1069, 2147483648
    %v1093 = vsel %vm1091, %v1092, %v1090
    %v1094 = vadd.f32 %v1081, 1e-06
    %v1095 = vadd.f32 %v1093, 1e-06
    %v1096 = vrcp.pop %v1094
    %v1097 = vmul.f32 %v1094, %v1096
    %v1098 = vsub.f32 1.0, %v1097
    %v1099 = vmul.f32 %v1096, %v1098
    %v1100 = vadd.f32 %v1096, %v1099
    %vm1101 = vweird.f32 %v1094
    %vm1102 = vweird.f32 %v1096
    %vm1103 = vmor %vm1101, %vm1102
    %v1104 = vsel %vm1103, %v1096, %v1100
    %v1105 = vand.u32 2147483647, %v1094
    %vm1106 = vcmp.eq.f32.partialorder %v1105, 8.507059e+37
    %v1107 = vand.u32 %v1094, 2147483648
    %v1108 = vor.u32 1.1754944e-38, %v1107
    %v1109 = vsel %vm1106, %v1108, %v1104
    %v1110 = vmul.f32 1.0, %v1109
    %v1111 = vrcp.pop %v1095
    %v1112 = vmul.f32 %v1095, %v1111
    %v1113 = vsub.f32 1.0, %v1112
    %v1114 = vmul.f32 %v1111, %v1113
    %v1115 = vadd.f32 %v1111, %v1114
    %vm1116 = vweird.f32 %v1095
    %vm1117 = vweird.f32 %v1111
    %vm1118 = vmor %vm1116, %vm1117
    %v1119 = vsel %vm1118, %v1111, %v1115
    %v1120 = vand.u32 2147483647, %v1095
    %vm1121 = vcmp.eq.f32.partialorder %v1120, 8.507059e+37
    %v1122 = vand.u32 %v1095, 2147483648
    %v1123 = vor.u32 1.1754944e-38, %v1122
    %v1124 = vsel %vm1121, %v1123, %v1119
    %v1125 = vmul.f32 1.0, %v1124
    %v1127 = vperm.slane %v1047, 0
    %v1129 = vmul.f32 %v1127, %v1058
    %v1130 = vmul.f32 %v1127, %v1059
    %v1131 = vmul.f32 %v1129, %v1110
    %v1132 = vmul.f32 %v1130, %v1125
    %v1134 = vperm.slane %v1049, 0
    %v1136 = vadd.f32 %v1131, %v1134
    %v1137 = vadd.f32 %v1132, %v1134
    %v1138 = vpack.c.bf16 %v1137, %v1136
    %s1139 = scalar_lea.vmem %s7, 16
    %v1140 = vld [vmem:[%s1139] sm:$0xf]
    %v1141 = vld [vmem:[%s1139 + $0x4] sm:$0xf]
    %v1142 = vld [vmem:[%s1139 + $0x8] sm:$0xf]
    %v1143 = vld [vmem:[%s1139 + $0xc] sm:$0xf]
    %v1148 = vunpack.c.l.b16 %v1140
    %v1149 = vunpack.c.l.b16 %v1141
    %v1150 = vunpack.c.l.b16 %v1142
    %v1151 = vunpack.c.l.b16 %v1143
    %v1152 = vpack.c.b16 %v1149, %v1148
    %v1153 = vpack.c.b16 %v1151, %v1150
    %v1157 = vsel %vm136, %v1138, 0
    %1159 = vmatpush.bf16.msra.mxu0 0
    %1160 = vmatpush.bf16.msra.mxu0 0
    %1161 = vmatpush.bf16.msra.mxu0 0
    %1162 = vmatpush.bf16.msra.mxu0 0
    %1163 = vmatpush.bf16.msra.mxu0 0
    %1164 = vmatpush.bf16.msra.mxu0 0
    %1165 = vmatpush.bf16.msra.mxu0 %v1153
    %1166 = vmatpush.bf16.msra.mxu0 %v1152
    %1167 = vmatmul.bf16.gmra.mxu0 %v1157
    %v1168 = vpop.f32.mrf.mxu0
    %v1169 = vadd.f32 0.0, %v1168
    %v1170 = vpop.f32.mrf.mxu0
    %v1171 = vadd.f32 0.0, %v1170
    %1172 = vdwg.mxu0
    %1175 = vrot.lane.b32.xlu0 %v1169, 120
    %v1176 = vpop.permute.xlu0 %1175
    %1177 = vrot.lane.b32.xlu0 %v1171, 120
    %v1178 = vpop.permute.xlu0 %1177
    %1181 = vrot.lane.b32.xlu0 %v1169, 112
    %v1182 = vpop.permute.xlu0 %1181
    %1183 = vrot.lane.b32.xlu0 %v1171, 112
    %v1184 = vpop.permute.xlu0 %1183
    %1187 = vrot.lane.b32.xlu0 %v1169, 104
    %v1188 = vpop.permute.xlu0 %1187
    %1189 = vrot.lane.b32.xlu0 %v1171, 104
    %v1190 = vpop.permute.xlu0 %1189
    %v1193 = vpack.c.bf16 %v1169, %v1169
    %v1194 = vpack.c.bf16 %v1171, %v1171
    %v1195 = vpack.c.bf16 %v1176, %v1176
    %v1196 = vpack.c.bf16 %v1178, %v1178
    %v1197 = vpack.c.bf16 %v1182, %v1182
    %v1198 = vpack.c.bf16 %v1184, %v1184
    %v1199 = vpack.c.bf16 %v1188, %v1188
    %v1200 = vpack.c.bf16 %v1190, %v1190
    %v1203 = vunpack.c.l.b16 %v1193
    %v1204 = vunpack.c.l.b16 %v1194
    %v1205 = vpack.c.b16 %v1204, %v1203
    %1206 = vrot.lane.b32.xlu0 %v1205, 96
    %v1207 = vpop.permute.xlu0 %1206
    %v1209 = vsel %vm301, %v1205, 0
    %v1212 = vsel %vm301, %v1207, 0
    %1214 = vmatpush.bf16.xpose.msra.mxu0 0
    %1215 = vmatpush.bf16.xpose.msra.mxu0 0
    %1216 = vmatpush.bf16.xpose.msra.mxu0 0
    %1217 = vmatpush.bf16.xpose.msra.mxu0 0
    %1218 = vmatpush.bf16.xpose.msra.mxu0 0
    %1219 = vmatpush.bf16.xpose.msra.mxu0 0
    %1220 = vmatpush.bf16.xpose.msra.mxu0 0
    %1221 = vmatpush.bf16.xpose.msra.mxu0 %v1212
    %1222 = vmatmul.bf16.gmra.mxu0 %v1209
    %v1223 = vpop.f32.mrf.mxu0
    %v1224 = vadd.f32 %v128, %v1223
    %v1225 = vpop.f32.mrf.mxu0
    %v1226 = vadd.f32 %v129, %v1225
    %1227 = vdwg.mxu0
    %v1230 = vunpack.c.l.b16 %v1195
    %v1231 = vunpack.c.l.b16 %v1196
    %v1232 = vpack.c.b16 %v1231, %v1230
    %1233 = vrot.lane.b32.xlu0 %v1232, 96
    %v1234 = vpop.permute.xlu0 %1233
    %v1236 = vsel %vm301, %v1232, 0
    %v1239 = vsel %vm301, %v1234, 0
    %1241 = vmatpush.bf16.xpose.msra.mxu0 0
    %1242 = vmatpush.bf16.xpose.msra.mxu0 0
    %1243 = vmatpush.bf16.xpose.msra.mxu0 0
    %1244 = vmatpush.bf16.xpose.msra.mxu0 0
    %1245 = vmatpush.bf16.xpose.msra.mxu0 0
    %1246 = vmatpush.bf16.xpose.msra.mxu0 0
    %1247 = vmatpush.bf16.xpose.msra.mxu0 0
    %1248 = vmatpush.bf16.xpose.msra.mxu0 %v1239
    %1249 = vmatmul.bf16.gmra.mxu0 %v1236
    %v1250 = vpop.f32.mrf.mxu0
    %v1251 = vadd.f32 %v128, %v1250
    %v1252 = vpop.f32.mrf.mxu0
    %v1253 = vadd.f32 %v129, %v1252
    %1254 = vdwg.mxu0
    %v1257 = vunpack.c.l.b16 %v1197
    %v1258 = vunpack.c.l.b16 %v1198
    %v1259 = vpack.c.b16 %v1258, %v1257
    %1260 = vrot.lane.b32.xlu0 %v1259, 96
    %v1261 = vpop.permute.xlu0 %1260
    %v1263 = vsel %vm301, %v1259, 0
    %v1266 = vsel %vm301, %v1261, 0
    %1268 = vmatpush.bf16.xpose.msra.mxu0 0
    %1269 = vmatpush.bf16.xpose.msra.mxu0 0
    %1270 = vmatpush.bf16.xpose.msra.mxu0 0
    %1271 = vmatpush.bf16.xpose.msra.mxu0 0
    %1272 = vmatpush.bf16.xpose.msra.mxu0 0
    %1273 = vmatpush.bf16.xpose.msra.mxu0 0
    %1274 = vmatpush.bf16.xpose.msra.mxu0 0
    %1275 = vmatpush.bf16.xpose.msra.mxu0 %v1266
    %1276 = vmatmul.bf16.gmra.mxu0 %v1263
    %v1277 = vpop.f32.mrf.mxu0
    %v1278 = vadd.f32 %v128, %v1277
    %v1279 = vpop.f32.mrf.mxu0
    %v1280 = vadd.f32 %v129, %v1279
    %1281 = vdwg.mxu0
    %v1284 = vunpack.c.l.b16 %v1199
    %v1285 = vunpack.c.l.b16 %v1200
    %v1286 = vpack.c.b16 %v1285, %v1284
    %1287 = vrot.lane.b32.xlu0 %v1286, 96
    %v1288 = vpop.permute.xlu0 %1287
    %v1290 = vsel %vm301, %v1286, 0
    %v1293 = vsel %vm301, %v1288, 0
    %1295 = vmatpush.bf16.xpose.msra.mxu0 0
    %1296 = vmatpush.bf16.xpose.msra.mxu0 0
    %1297 = vmatpush.bf16.xpose.msra.mxu0 0
    %1298 = vmatpush.bf16.xpose.msra.mxu0 0
    %1299 = vmatpush.bf16.xpose.msra.mxu0 0
    %1300 = vmatpush.bf16.xpose.msra.mxu0 0
    %1301 = vmatpush.bf16.xpose.msra.mxu0 0
    %1302 = vmatpush.bf16.xpose.msra.mxu0 %v1293
    %1303 = vmatmul.bf16.gmra.mxu0 %v1290
    %v1304 = vpop.f32.mrf.mxu0
    %v1305 = vadd.f32 %v128, %v1304
    %v1306 = vpop.f32.mrf.mxu0
    %v1307 = vadd.f32 %v129, %v1306
    %1308 = vdwg.mxu0
    %v1309 = vsel %vm403, %v1224, -inf
    %1310 = vmax.xlane.f32.xlu0 %v1309
    %v1311 = vpop.xlane.xlu0 %1310
    %v1312 = vsel %vm403, %v1226, -inf
    %1313 = vmax.xlane.f32.xlu0 %v1312
    %v1314 = vpop.xlane.xlu0 %1313
    %v1315 = vsel %vm403, %v1251, -inf
    %1316 = vmax.xlane.f32.xlu0 %v1315
    %v1317 = vpop.xlane.xlu0 %1316
    %v1318 = vsel %vm403, %v1253, -inf
    %1319 = vmax.xlane.f32.xlu0 %v1318
    %v1320 = vpop.xlane.xlu0 %1319
    %v1321 = vsel %vm403, %v1278, -inf
    %1322 = vmax.xlane.f32.xlu0 %v1321
    %v1323 = vpop.xlane.xlu0 %1322
    %v1324 = vsel %vm403, %v1280, -inf
    %1325 = vmax.xlane.f32.xlu0 %v1324
    %v1326 = vpop.xlane.xlu0 %1325
    %v1327 = vsel %vm403, %v1305, -inf
    %1328 = vmax.xlane.f32.xlu0 %v1327
    %v1329 = vpop.xlane.xlu0 %1328
    %v1330 = vsel %vm403, %v1307, -inf
    %1331 = vmax.xlane.f32.xlu0 %v1330
    %v1332 = vpop.xlane.xlu0 %1331
    %v1333 = vsub.f32 %v1224, %v1311
    %v1334 = vsub.f32 %v1226, %v1314
    %v1335 = vsub.f32 %v1251, %v1317
    %v1336 = vsub.f32 %v1253, %v1320
    %v1337 = vsub.f32 %v1278, %v1323
    %v1338 = vsub.f32 %v1280, %v1326
    %v1339 = vsub.f32 %v1305, %v1329
    %v1340 = vsub.f32 %v1307, %v1332
    %v1341 = vmul.f32 %v1333, 1.442695
    %v1342 = vpow.pop %v1341
    %v1343 = vmul.f32 %v1334, 1.442695
    %v1344 = vpow.pop %v1343
    %v1345 = vmul.f32 %v1335, 1.442695
    %v1346 = vpow.pop %v1345
    %v1347 = vmul.f32 %v1336, 1.442695
    %v1348 = vpow.pop %v1347
    %v1349 = vmul.f32 %v1337, 1.442695
    %v1350 = vpow.pop %v1349
    %v1351 = vmul.f32 %v1338, 1.442695
    %v1352 = vpow.pop %v1351
    %v1353 = vmul.f32 %v1339, 1.442695
    %v1354 = vpow.pop %v1353
    %v1355 = vmul.f32 %v1340, 1.442695
    %v1356 = vpow.pop %v1355
    %v1357 = vsel %vm403, %v1342, 0.0
    %1358 = vadd.xlane.f32.xlu0 %v1357
    %v1359 = vpop.xlane.xlu0 %1358
    %v1360 = vsel %vm403, %v1344, 0.0
    %1361 = vadd.xlane.f32.xlu0 %v1360
    %v1362 = vpop.xlane.xlu0 %1361
    %v1363 = vsel %vm403, %v1346, 0.0
    %1364 = vadd.xlane.f32.xlu0 %v1363
    %v1365 = vpop.xlane.xlu0 %1364
    %v1366 = vsel %vm403, %v1348, 0.0
    %1367 = vadd.xlane.f32.xlu0 %v1366
    %v1368 = vpop.xlane.xlu0 %1367
    %v1369 = vsel %vm403, %v1350, 0.0
    %1370 = vadd.xlane.f32.xlu0 %v1369
    %v1371 = vpop.xlane.xlu0 %1370
    %v1372 = vsel %vm403, %v1352, 0.0
    %1373 = vadd.xlane.f32.xlu0 %v1372
    %v1374 = vpop.xlane.xlu0 %1373
    %v1375 = vsel %vm403, %v1354, 0.0
    %1376 = vadd.xlane.f32.xlu0 %v1375
    %v1377 = vpop.xlane.xlu0 %1376
    %v1378 = vsel %vm403, %v1356, 0.0
    %1379 = vadd.xlane.f32.xlu0 %v1378
    %v1380 = vpop.xlane.xlu0 %1379
    %v1381 = vrcp.pop %v1359
    %v1382 = vrcp.pop %v1362
    %v1383 = vrcp.pop %v1365
    %v1384 = vrcp.pop %v1368
    %v1385 = vrcp.pop %v1371
    %v1386 = vrcp.pop %v1374
    %v1387 = vrcp.pop %v1377
    %v1388 = vrcp.pop %v1380
    %v1389 = vmul.f32 %v1342, %v1381
    %v1390 = vmul.f32 %v1344, %v1382
    %v1391 = vmul.f32 %v1346, %v1383
    %v1392 = vmul.f32 %v1348, %v1384
    %v1393 = vmul.f32 %v1350, %v1385
    %v1394 = vmul.f32 %v1352, %v1386
    %v1395 = vmul.f32 %v1354, %v1387
    %v1396 = vmul.f32 %v1356, %v1388
    %v1397 = vpack.c.bf16 %v1389, %v1389
    %v1398 = vpack.c.bf16 %v1390, %v1390
    %v1399 = vpack.c.bf16 %v1391, %v1391
    %v1400 = vpack.c.bf16 %v1392, %v1392
    %v1401 = vpack.c.bf16 %v1393, %v1393
    %v1402 = vpack.c.bf16 %v1394, %v1394
    %v1403 = vpack.c.bf16 %v1395, %v1395
    %v1404 = vpack.c.bf16 %v1396, %v1396
    %v1407 = vunpack.c.l.b16 %v1397
    %v1408 = vunpack.c.l.b16 %v1398
    %v1409 = vpack.c.b16 %v1408, %v1407
    %1410 = vrot.lane.b32.xlu0 %v1205, 64
    %v1411 = vpop.permute.xlu0 %1410
    %v1414 = vsel %vm403, %v1409, 0
    %1416 = vmatpush.bf16.msra.mxu0 0
    %1417 = vmatpush.bf16.msra.mxu0 0
    %1418 = vmatpush.bf16.msra.mxu0 0
    %1419 = vmatpush.bf16.msra.mxu0 0
    %1420 = vmatpush.bf16.msra.mxu0 0
    %1421 = vmatpush.bf16.msra.mxu0 0
    %1422 = vmatpush.bf16.msra.mxu0 0
    %1423 = vmatpush.bf16.msra.mxu0 %v1411
    %1424 = vmatmul.bf16.gmra.mxu0 %v1414
    %v1425 = vpop.f32.mrf.mxu0
    %v1426 = vadd.f32 0.0, %v1425
    %v1427 = vpop.f32.mrf.mxu0
    %v1428 = vadd.f32 0.0, %v1427
    %1429 = vdwg.mxu0
    %v1432 = vunpack.c.l.b16 %v1399
    %v1433 = vunpack.c.l.b16 %v1400
    %v1434 = vpack.c.b16 %v1433, %v1432
    %1435 = vrot.lane.b32.xlu0 %v1232, 64
    %v1436 = vpop.permute.xlu0 %1435
    %v1439 = vsel %vm403, %v1434, 0
    %1441 = vmatpush.bf16.msra.mxu0 0
    %1442 = vmatpush.bf16.msra.mxu0 0
    %1443 = vmatpush.bf16.msra.mxu0 0
    %1444 = vmatpush.bf16.msra.mxu0 0
    %1445 = vmatpush.bf16.msra.mxu0 0
    %1446 = vmatpush.bf16.msra.mxu0 0
    %1447 = vmatpush.bf16.msra.mxu0 0
    %1448 = vmatpush.bf16.msra.mxu0 %v1436
    %1449 = vmatmul.bf16.gmra.mxu0 %v1439
    %v1450 = vpop.f32.mrf.mxu0
    %v1451 = vadd.f32 0.0, %v1450
    %v1452 = vpop.f32.mrf.mxu0
    %v1453 = vadd.f32 0.0, %v1452
    %1454 = vdwg.mxu0
    %v1457 = vunpack.c.l.b16 %v1401
    %v1458 = vunpack.c.l.b16 %v1402
    %v1459 = vpack.c.b16 %v1458, %v1457
    %1460 = vrot.lane.b32.xlu0 %v1259, 64
    %v1461 = vpop.permute.xlu0 %1460
    %v1464 = vsel %vm403, %v1459, 0
    %1466 = vmatpush.bf16.msra.mxu0 0
    %1467 = vmatpush.bf16.msra.mxu0 0
    %1468 = vmatpush.bf16.msra.mxu0 0
    %1469 = vmatpush.bf16.msra.mxu0 0
    %1470 = vmatpush.bf16.msra.mxu0 0
    %1471 = vmatpush.bf16.msra.mxu0 0
    %1472 = vmatpush.bf16.msra.mxu0 0
    %1473 = vmatpush.bf16.msra.mxu0 %v1461
    %1474 = vmatmul.bf16.gmra.mxu0 %v1464
    %v1475 = vpop.f32.mrf.mxu0
    %v1476 = vadd.f32 0.0, %v1475
    %v1477 = vpop.f32.mrf.mxu0
    %v1478 = vadd.f32 0.0, %v1477
    %1479 = vdwg.mxu0
    %v1482 = vunpack.c.l.b16 %v1403
    %v1483 = vunpack.c.l.b16 %v1404
    %v1484 = vpack.c.b16 %v1483, %v1482
    %1485 = vrot.lane.b32.xlu0 %v1286, 64
    %v1486 = vpop.permute.xlu0 %1485
    %v1489 = vsel %vm403, %v1484, 0
    %1491 = vmatpush.bf16.msra.mxu0 0
    %1492 = vmatpush.bf16.msra.mxu0 0
    %1493 = vmatpush.bf16.msra.mxu0 0
    %1494 = vmatpush.bf16.msra.mxu0 0
    %1495 = vmatpush.bf16.msra.mxu0 0
    %1496 = vmatpush.bf16.msra.mxu0 0
    %1497 = vmatpush.bf16.msra.mxu0 0
    %1498 = vmatpush.bf16.msra.mxu0 %v1486
    %1499 = vmatmul.bf16.gmra.mxu0 %v1489
    %v1500 = vpop.f32.mrf.mxu0
    %v1501 = vadd.f32 0.0, %v1500
    %v1502 = vpop.f32.mrf.mxu0
    %v1503 = vadd.f32 0.0, %v1502
    %1504 = vdwg.mxu0
    %1507 = vrot.lane.b32.xlu0 %v1451, 8
    %v1508 = vpop.permute.xlu0 %1507
    %1509 = vrot.lane.b32.xlu0 %v1453, 8
    %v1510 = vpop.permute.xlu0 %1509
    %1515 = vrot.lane.b32.xlu0 %v1476, 16
    %v1516 = vpop.permute.xlu0 %1515
    %1517 = vrot.lane.b32.xlu0 %v1478, 16
    %v1518 = vpop.permute.xlu0 %1517
    %1523 = vrot.lane.b32.xlu0 %v1501, 24
    %v1524 = vpop.permute.xlu0 %1523
    %1525 = vrot.lane.b32.xlu0 %v1503, 24
    %v1526 = vpop.permute.xlu0 %1525
    %v1529 = vsel %vm301, %v1426, %v1508
    %v1530 = vsel %vm301, %v1428, %v1510
    %v1531 = vsel %vm403, %v1529, %v1516
    %v1532 = vsel %vm403, %v1530, %v1518
    %v1533 = vsel %vm628, %v1531, %v1524
    %v1534 = vsel %vm628, %v1532, %v1526
    %v1535 = vpack.c.bf16 %v1534, %v1533
    %s1536 = scalar_lea.vmem %s8, 16
    %v1537 = vld [vmem:[%s1536] sm:$0xf]
    %v1538 = vld [vmem:[%s1536 + $0x4] sm:$0xf]
    %v1539 = vld [vmem:[%s1536 + $0x8] sm:$0xf]
    %v1540 = vld [vmem:[%s1536 + $0xc] sm:$0xf]
    %v1545 = vunpack.c.l.b16 %v1537
    %v1546 = vunpack.c.l.b16 %v1538
    %v1547 = vunpack.c.l.b16 %v1539
    %v1548 = vunpack.c.l.b16 %v1540
    %v1549 = vpack.c.b16 %v1546, %v1545
    %v1550 = vpack.c.b16 %v1548, %v1547
    %v1554 = vsel %vm136, %v1535, 0
    %1556 = vmatpush.bf16.msra.mxu0 0
    %1557 = vmatpush.bf16.msra.mxu0 0
    %1558 = vmatpush.bf16.msra.mxu0 0
    %1559 = vmatpush.bf16.msra.mxu0 0
    %1560 = vmatpush.bf16.msra.mxu0 0
    %1561 = vmatpush.bf16.msra.mxu0 0
    %1562 = vmatpush.bf16.msra.mxu0 %v1550
    %1563 = vmatpush.bf16.msra.mxu0 %v1549
    %1564 = vmatmul.bf16.gmra.mxu0 %v1554
    %v1565 = vpop.f32.mrf.mxu0
    %v1566 = vadd.f32 0.0, %v1565
    %v1567 = vpop.f32.mrf.mxu0
    %v1568 = vadd.f32 0.0, %v1567
    %1569 = vdwg.mxu0
    %v1570 = vadd.f32 %v1044, %v1566
    %v1571 = vadd.f32 %v1045, %v1568
    %s1572 = scalar_lea.vmem %s15, 1
    %v1573 = vld [vmem:[%s1572] sm:$0x1]
    %s1574 = scalar_lea.vmem %s16, 1
    %v1575 = vld [vmem:[%s1574] sm:$0x1]
    %v1576 = vsel %vm136, %v1570, 0.0
    %1577 = vadd.xlane.f32.xlu0 %v1576
    %v1578 = vpop.xlane.xlu0 %1577
    %v1579 = vsel %vm136, %v1571, 0.0
    %1580 = vadd.xlane.f32.xlu0 %v1579
    %v1581 = vpop.xlane.xlu0 %1580
    %v1582 = vmul.f32 %v1578, %v149
    %v1583 = vmul.f32 %v1581, %v149
    %v1584 = vsub.f32 %v1570, %v1582
    %v1585 = vsub.f32 %v1571, %v1583
    %v1586 = vmul.f32 %v1584, %v1584
    %v1587 = vmul.f32 %v1585, %v1585
    %v1588 = vsel %vm136, %v1586, 0.0
    %1589 = vadd.xlane.f32.xlu0 %v1588
    %v1590 = vpop.xlane.xlu0 %1589
    %v1591 = vsel %vm136, %v1587, 0.0
    %1592 = vadd.xlane.f32.xlu0 %v1591
    %v1593 = vpop.xlane.xlu0 %1592
    %v1594 = vmul.f32 %v1590, 0.032258064
    %v1595 = vmul.f32 %v1593, 0.032258064
    %v1596 = vrsqrt.pop %v1594
    %v1597 = vmul.f32 %v1596, %v1594
    %v1598 = vmul.f32 %v1597, %v1596
    %v1599 = vmul.f32 0.5, %v1598
    %v1600 = vsub.f32 1.5, %v1599
    %v1601 = vmul.f32 %v1596, %v1600
    %v1602 = vmul.f32 %v1594, %v1601
    %vm1603 = vcmp.eq.f32.partialorder %v1594, inf
    %v1604 = vsel %vm1603, %v1594, %v1602
    %vm1605 = vcmp.eq.f32.partialorder %v1594, 0.0
    %v1606 = vand.u32 %v1594, 2147483648
    %v1607 = vsel %vm1605, %v1606, %v1604
    %v1608 = vrsqrt.pop %v1595
    %v1609 = vmul.f32 %v1608, %v1595
    %v1610 = vmul.f32 %v1609, %v1608
    %v1611 = vmul.f32 0.5, %v1610
    %v1612 = vsub.f32 1.5, %v1611
    %v1613 = vmul.f32 %v1608, %v1612
    %v1614 = vmul.f32 %v1595, %v1613
    %vm1615 = vcmp.eq.f32.partialorder %v1595, inf
    %v1616 = vsel %vm1615, %v1595, %v1614
    %vm1617 = vcmp.eq.f32.partialorder %v1595, 0.0
    %v1618 = vand.u32 %v1595, 2147483648
    %v1619 = vsel %vm1617, %v1618, %v1616
    %v1620 = vadd.f32 %v1607, 1e-06
    %v1621 = vadd.f32 %v1619, 1e-06
    %v1622 = vrcp.pop %v1620
    %v1623 = vmul.f32 %v1620, %v1622
    %v1624 = vsub.f32 1.0, %v1623
    %v1625 = vmul.f32 %v1622, %v1624
    %v1626 = vadd.f32 %v1622, %v1625
    %vm1627 = vweird.f32 %v1620
    %vm1628 = vweird.f32 %v1622
    %vm1629 = vmor %vm1627, %vm1628
    %v1630 = vsel %vm1629, %v1622, %v1626
    %v1631 = vand.u32 2147483647, %v1620
    %vm1632 = vcmp.eq.f32.partialorder %v1631, 8.507059e+37
    %v1633 = vand.u32 %v1620, 2147483648
    %v1634 = vor.u32 1.1754944e-38, %v1633
    %v1635 = vsel %vm1632, %v1634, %v1630
    %v1636 = vmul.f32 1.0, %v1635
    %v1637 = vrcp.pop %v1621
    %v1638 = vmul.f32 %v1621, %v1637
    %v1639 = vsub.f32 1.0, %v1638
    %v1640 = vmul.f32 %v1637, %v1639
    %v1641 = vadd.f32 %v1637, %v1640
    %vm1642 = vweird.f32 %v1621
    %vm1643 = vweird.f32 %v1637
    %vm1644 = vmor %vm1642, %vm1643
    %v1645 = vsel %vm1644, %v1637, %v1641
    %v1646 = vand.u32 2147483647, %v1621
    %vm1647 = vcmp.eq.f32.partialorder %v1646, 8.507059e+37
    %v1648 = vand.u32 %v1621, 2147483648
    %v1649 = vor.u32 1.1754944e-38, %v1648
    %v1650 = vsel %vm1647, %v1649, %v1645
    %v1651 = vmul.f32 1.0, %v1650
    %v1653 = vperm.slane %v1573, 0
    %v1655 = vmul.f32 %v1653, %v1584
    %v1656 = vmul.f32 %v1653, %v1585
    %v1657 = vmul.f32 %v1655, %v1636
    %v1658 = vmul.f32 %v1656, %v1651
    %v1660 = vperm.slane %v1575, 0
    %v1662 = vadd.f32 %v1657, %v1660
    %v1663 = vadd.f32 %v1658, %v1660
    %v1664 = vrot.slane %v1662, 7
    %v1665 = vrot.slane %v1663, 7
    %v1666 = vsel %vm761, %v1664, %v1665
    %v1667 = vsel %vm761, %v1665, %v1664
    %v1668 = vmul.f32 %v1667, %v767
    %v1669 = vmul.f32 %v1666, %v772
    %v1670 = vrot.slane %v1662, 1
    %v1671 = vrot.slane %v1663, 1
    %v1672 = vsel %vm778, %v1670, %v1671
    %v1673 = vsel %vm778, %v1671, %v1670
    %v1674 = vmul.f32 %v1672, %v784
    %v1675 = vmul.f32 %v1673, %v789
    %1678 = vrot.lane.b32.xlu0 %v1662, 32
    %v1679 = vpop.permute.xlu0 %1678
    %1680 = vrot.lane.b32.xlu0 %v1663, 32
    %v1681 = vpop.permute.xlu0 %1680
    %1686 = vrot.lane.b32.xlu0 %v1674, 64
    %v1687 = vpop.permute.xlu0 %1686
    %1688 = vrot.lane.b32.xlu0 %v1675, 64
    %v1689 = vpop.permute.xlu0 %1688
    %v1692 = vsel %vm136, %v1668, %v1679
    %v1693 = vsel %vm136, %v1669, %v1681
    %v1694 = vsel %vm811, %v1692, %v1687
    %v1695 = vsel %vm811, %v1693, %v1689
    %v1696 = vpack.c.bf16 %v1695, %v1694
    %s1697 = scalar_lea.vmem %s9, 48
    %v1698 = vld [vmem:[%s1697] sm:$0xf]
    %v1699 = vld [vmem:[%s1697 + $0x4] sm:$0xf]
    %v1700 = vld [vmem:[%s1697 + $0x8] sm:$0xf]
    %v1701 = vld [vmem:[%s1697 + $0xc] sm:$0xf]
    %v1702 = vld [vmem:[%s1697 + $0x10] sm:$0xf]
    %v1703 = vld [vmem:[%s1697 + $0x14] sm:$0xf]
    %v1704 = vld [vmem:[%s1697 + $0x18] sm:$0xf]
    %v1705 = vld [vmem:[%s1697 + $0x1c] sm:$0xf]
    %v1706 = vld [vmem:[%s1697 + $0x20] sm:$0xf]
    %v1707 = vld [vmem:[%s1697 + $0x24] sm:$0xf]
    %v1708 = vld [vmem:[%s1697 + $0x28] sm:$0xf]
    %v1709 = vld [vmem:[%s1697 + $0x2c] sm:$0xf]
    %s1710 = scalar_lea.vmem %s10, 1
    %v1711 = vld [vmem:[%s1710] sm:$0x1]
    %v1713 = vperm.slane %v1711, 0
    %v1727 = vunpack.c.l.b16 %v1698
    %v1728 = vunpack.c.l.b16 %v1699
    %v1729 = vunpack.c.l.b16 %v1700
    %v1730 = vunpack.c.l.b16 %v1701
    %v1731 = vunpack.c.l.b16 %v1702
    %v1732 = vunpack.c.l.b16 %v1703
    %v1733 = vunpack.c.l.b16 %v1704
    %v1734 = vunpack.c.l.b16 %v1705
    %v1735 = vunpack.c.l.b16 %v1706
    %v1736 = vunpack.c.l.b16 %v1707
    %v1737 = vunpack.c.l.b16 %v1708
    %v1738 = vunpack.c.l.b16 %v1709
    %v1739 = vpack.c.b16 %v1728, %v1727
    %v1740 = vpack.c.b16 %v1730, %v1729
    %v1741 = vpack.c.b16 %v1732, %v1731
    %v1742 = vpack.c.b16 %v1734, %v1733
    %v1743 = vpack.c.b16 %v1736, %v1735
    %v1744 = vpack.c.b16 %v1738, %v1737
    %v1752 = vsel %vm867, %v1696, 0
    %1754 = vmatpush.bf16.msra.mxu0 0
    %1755 = vmatpush.bf16.msra.mxu0 0
    %1756 = vmatpush.bf16.msra.mxu0 %v1744
    %1757 = vmatpush.bf16.msra.mxu0 %v1743
    %1758 = vmatpush.bf16.msra.mxu0 %v1742
    %1759 = vmatpush.bf16.msra.mxu0 %v1741
    %1760 = vmatpush.bf16.msra.mxu0 %v1740
    %1761 = vmatpush.bf16.msra.mxu0 %v1739
    %1762 = vmatmul.bf16.gmra.mxu0 %v1752
    %v1763 = vpop.f32.mrf.mxu0
    %v1764 = vadd.f32 %v1713, %v1763
    %v1765 = vpop.f32.mrf.mxu0
    %v1766 = vadd.f32 %v1713, %v1765
    %1767 = vdwg.mxu0
    %v1768 = vmax.f32 %v1764, 0.0
    %v1769 = vmax.f32 %v1766, 0.0
    %v1770 = vrot.slane %v1768, 7
    %v1771 = vrot.slane %v1769, 7
    %v1772 = vsel %vm761, %v1770, %v1771
    %v1773 = vsel %vm761, %v1771, %v1770
    %v1774 = vmul.f32 %v1773, %v767
    %v1775 = vmul.f32 %v1772, %v772
    %v1776 = vrot.slane %v1768, 1
    %v1777 = vrot.slane %v1769, 1
    %v1778 = vsel %vm778, %v1776, %v1777
    %v1779 = vsel %vm778, %v1777, %v1776
    %v1780 = vmul.f32 %v1778, %v784
    %v1781 = vmul.f32 %v1779, %v789
    %1784 = vrot.lane.b32.xlu0 %v1768, 64
    %v1785 = vpop.permute.xlu0 %1784
    %1786 = vrot.lane.b32.xlu0 %v1769, 64
    %v1787 = vpop.permute.xlu0 %1786
    %v1790 = vsel %vm811, %v1774, %v1785
    %v1791 = vsel %vm811, %v1775, %v1787
    %v1792 = vpack.c.bf16 %v1791, %v1790
    %v1793 = vpack.c.bf16 %v1781, %v1780
    %s1794 = scalar_lea.vmem %s11, 96
    %v1795 = vld [vmem:[%s1794] sm:$0xf]
    %v1796 = vld [vmem:[%s1794 + $0x4] sm:$0xf]
    %v1797 = vld [vmem:[%s1794 + $0x8] sm:$0xf]
    %v1798 = vld [vmem:[%s1794 + $0xc] sm:$0xf]
    %v1799 = vld [vmem:[%s1794 + $0x10] sm:$0xf]
    %v1800 = vld [vmem:[%s1794 + $0x14] sm:$0xf]
    %v1801 = vld [vmem:[%s1794 + $0x18] sm:$0xf]
    %v1802 = vld [vmem:[%s1794 + $0x1c] sm:$0xf]
    %v1803 = vld [vmem:[%s1794 + $0x20] sm:$0xf]
    %v1804 = vld [vmem:[%s1794 + $0x24] sm:$0xf]
    %v1805 = vld [vmem:[%s1794 + $0x28] sm:$0xf]
    %v1806 = vld [vmem:[%s1794 + $0x2c] sm:$0xf]
    %v1807 = vld [vmem:[%s1794 + $0x30] sm:$0xf]
    %v1808 = vld [vmem:[%s1794 + $0x34] sm:$0xf]
    %v1809 = vld [vmem:[%s1794 + $0x38] sm:$0xf]
    %v1810 = vld [vmem:[%s1794 + $0x3c] sm:$0xf]
    %v1811 = vld [vmem:[%s1794 + $0x40] sm:$0xf]
    %v1812 = vld [vmem:[%s1794 + $0x44] sm:$0xf]
    %v1813 = vld [vmem:[%s1794 + $0x48] sm:$0xf]
    %v1814 = vld [vmem:[%s1794 + $0x4c] sm:$0xf]
    %v1815 = vld [vmem:[%s1794 + $0x50] sm:$0xf]
    %v1816 = vld [vmem:[%s1794 + $0x54] sm:$0xf]
    %v1817 = vld [vmem:[%s1794 + $0x58] sm:$0xf]
    %v1818 = vld [vmem:[%s1794 + $0x5c] sm:$0xf]
    %s1819 = scalar_lea.vmem %s12, 1
    %v1820 = vld [vmem:[%s1819] sm:$0x1]
    %v1822 = vperm.slane %v1820, 0
    %v1848 = vunpack.c.l.b16 %v1795
    %v1849 = vunpack.c.l.b16 %v1796
    %v1850 = vunpack.c.l.b16 %v1797
    %v1851 = vunpack.c.l.b16 %v1798
    %v1852 = vunpack.c.l.b16 %v1799
    %v1853 = vunpack.c.l.b16 %v1800
    %v1854 = vunpack.c.l.b16 %v1801
    %v1855 = vunpack.c.l.b16 %v1802
    %v1856 = vunpack.c.l.b16 %v1803
    %v1857 = vunpack.c.l.b16 %v1804
    %v1858 = vunpack.c.l.b16 %v1805
    %v1859 = vunpack.c.l.b16 %v1806
    %v1860 = vunpack.c.l.b16 %v1807
    %v1861 = vunpack.c.l.b16 %v1808
    %v1862 = vunpack.c.l.b16 %v1809
    %v1863 = vunpack.c.l.b16 %v1810
    %v1864 = vunpack.c.l.b16 %v1811
    %v1865 = vunpack.c.l.b16 %v1812
    %v1866 = vunpack.c.l.b16 %v1813
    %v1867 = vunpack.c.l.b16 %v1814
    %v1868 = vunpack.c.l.b16 %v1815
    %v1869 = vunpack.c.l.b16 %v1816
    %v1870 = vunpack.c.l.b16 %v1817
    %v1871 = vunpack.c.l.b16 %v1818
    %v1872 = vpack.c.b16 %v1849, %v1848
    %v1873 = vpack.c.b16 %v1851, %v1850
    %v1874 = vpack.c.b16 %v1853, %v1852
    %v1875 = vpack.c.b16 %v1855, %v1854
    %v1876 = vpack.c.b16 %v1857, %v1856
    %v1877 = vpack.c.b16 %v1859, %v1858
    %v1878 = vpack.c.b16 %v1861, %v1860
    %v1879 = vpack.c.b16 %v1863, %v1862
    %v1880 = vpack.c.b16 %v1865, %v1864
    %v1881 = vpack.c.b16 %v1867, %v1866
    %v1882 = vpack.c.b16 %v1869, %v1868
    %v1883 = vpack.c.b16 %v1871, %v1870
    %v1897 = vsel %vm811, %v1793, 0
    %1899 = vmatpush.bf16.msra.mxu0 %v1879
    %1900 = vmatpush.bf16.msra.mxu0 %v1878
    %1901 = vmatpush.bf16.msra.mxu0 %v1877
    %1902 = vmatpush.bf16.msra.mxu0 %v1876
    %1903 = vmatpush.bf16.msra.mxu0 %v1875
    %1904 = vmatpush.bf16.msra.mxu0 %v1874
    %1905 = vmatpush.bf16.msra.mxu0 %v1873
    %1906 = vmatpush.bf16.msra.mxu0 %v1872
    %1907 = vmatmul.bf16.gmra.mxu0 %v1792
    %v1908 = vpop.f32.mrf.mxu0
    %v1909 = vadd.f32 %v1822, %v1908
    %v1910 = vpop.f32.mrf.mxu0
    %v1911 = vadd.f32 %v1822, %v1910
    %1912 = vdwg.mxu0
    %1913 = vmatpush.bf16.msra.mxu0 0
    %1914 = vmatpush.bf16.msra.mxu0 0
    %1915 = vmatpush.bf16.msra.mxu0 0
    %1916 = vmatpush.bf16.msra.mxu0 0
    %1917 = vmatpush.bf16.msra.mxu0 %v1883
    %1918 = vmatpush.bf16.msra.mxu0 %v1882
    %1919 = vmatpush.bf16.msra.mxu0 %v1881
    %1920 = vmatpush.bf16.msra.mxu0 %v1880
    %1921 = vmatmul.bf16.gmra.mxu0 %v1897
    %v1922 = vpop.f32.mrf.mxu0
    %v1923 = vadd.f32 %v1909, %v1922
    %v1924 = vpop.f32.mrf.mxu0
    %v1925 = vadd.f32 %v1911, %v1924
    %1926 = vdwg.mxu0
    %v1927 = vmax.f32 %v1923, 0.0
    %v1928 = vmax.f32 %v1925, 0.0
    %v1929 = vadd.f32 %v1570, %v1927
    %v1930 = vadd.f32 %v1571, %v1928
    %v1931 = vld [vmem:[%s17] sm:$0x1]
    %v1932 = vld [vmem:[%s18] sm:$0x1]
    %v1933 = vsel %vm136, %v1929, 0.0
    %1934 = vadd.xlane.f32.xlu0 %v1933
    %v1935 = vpop.xlane.xlu0 %1934
    %v1936 = vsel %vm136, %v1930, 0.0
    %1937 = vadd.xlane.f32.xlu0 %v1936
    %v1938 = vpop.xlane.xlu0 %1937
    %v1939 = vmul.f32 %v1935, %v149
    %v1940 = vmul.f32 %v1938, %v149
    %v1941 = vsub.f32 %v1929, %v1939
    %v1942 = vsub.f32 %v1930, %v1940
    %v1943 = vmul.f32 %v1941, %v1941
    %v1944 = vmul.f32 %v1942, %v1942
    %v1945 = vsel %vm136, %v1943, 0.0
    %1946 = vadd.xlane.f32.xlu0 %v1945
    %v1947 = vpop.xlane.xlu0 %1946
    %v1948 = vsel %vm136, %v1944, 0.0
    %1949 = vadd.xlane.f32.xlu0 %v1948
    %v1950 = vpop.xlane.xlu0 %1949
    %v1951 = vmul.f32 %v1947, 0.032258064
    %v1952 = vmul.f32 %v1950, 0.032258064
    %v1953 = vrsqrt.pop %v1951
    %v1954 = vmul.f32 %v1953, %v1951
    %v1955 = vmul.f32 %v1954, %v1953
    %v1956 = vmul.f32 0.5, %v1955
    %v1957 = vsub.f32 1.5, %v1956
    %v1958 = vmul.f32 %v1953, %v1957
    %v1959 = vmul.f32 %v1951, %v1958
    %vm1960 = vcmp.eq.f32.partialorder %v1951, inf
    %v1961 = vsel %vm1960, %v1951, %v1959
    %vm1962 = vcmp.eq.f32.partialorder %v1951, 0.0
    %v1963 = vand.u32 %v1951, 2147483648
    %v1964 = vsel %vm1962, %v1963, %v1961
    %v1965 = vrsqrt.pop %v1952
    %v1966 = vmul.f32 %v1965, %v1952
    %v1967 = vmul.f32 %v1966, %v1965
    %v1968 = vmul.f32 0.5, %v1967
    %v1969 = vsub.f32 1.5, %v1968
    %v1970 = vmul.f32 %v1965, %v1969
    %v1971 = vmul.f32 %v1952, %v1970
    %vm1972 = vcmp.eq.f32.partialorder %v1952, inf
    %v1973 = vsel %vm1972, %v1952, %v1971
    %vm1974 = vcmp.eq.f32.partialorder %v1952, 0.0
    %v1975 = vand.u32 %v1952, 2147483648
    %v1976 = vsel %vm1974, %v1975, %v1973
    %v1977 = vadd.f32 %v1964, 1e-06
    %v1978 = vadd.f32 %v1976, 1e-06
    %v1979 = vrcp.pop %v1977
    %v1980 = vmul.f32 %v1977, %v1979
    %v1981 = vsub.f32 1.0, %v1980
    %v1982 = vmul.f32 %v1979, %v1981
    %v1983 = vadd.f32 %v1979, %v1982
    %vm1984 = vweird.f32 %v1977
    %vm1985 = vweird.f32 %v1979
    %vm1986 = vmor %vm1984, %vm1985
    %v1987 = vsel %vm1986, %v1979, %v1983
    %v1988 = vand.u32 2147483647, %v1977
    %vm1989 = vcmp.eq.f32.partialorder %v1988, 8.507059e+37
    %v1990 = vand.u32 %v1977, 2147483648
    %v1991 = vor.u32 1.1754944e-38, %v1990
    %v1992 = vsel %vm1989, %v1991, %v1987
    %v1993 = vmul.f32 1.0, %v1992
    %v1994 = vrcp.pop %v1978
    %v1995 = vmul.f32 %v1978, %v1994
    %v1996 = vsub.f32 1.0, %v1995
    %v1997 = vmul.f32 %v1994, %v1996
    %v1998 = vadd.f32 %v1994, %v1997
    %vm1999 = vweird.f32 %v1978
    %vm2000 = vweird.f32 %v1994
    %vm2001 = vmor %vm1999, %vm2000
    %v2002 = vsel %vm2001, %v1994, %v1998
    %v2003 = vand.u32 2147483647, %v1978
    %vm2004 = vcmp.eq.f32.partialorder %v2003, 8.507059e+37
    %v2005 = vand.u32 %v1978, 2147483648
    %v2006 = vor.u32 1.1754944e-38, %v2005
    %v2007 = vsel %vm2004, %v2006, %v2002
    %v2008 = vmul.f32 1.0, %v2007
    %v2010 = vperm.slane %v1931, 0
    %v2012 = vmul.f32 %v2010, %v1941
    %v2013 = vmul.f32 %v2010, %v1942
    %v2014 = vmul.f32 %v2012, %v1993
    %v2015 = vmul.f32 %v2013, %v2008
    %v2017 = vperm.slane %v1932, 0
    %v2019 = vadd.f32 %v2014, %v2017
    %v2020 = vadd.f32 %v2015, %v2017
    %2021 = vst.msk [vmem:[#allocation2] sm:$0xff] %vm136, %v2019
    %2022 = vst.msk [vmem:[#allocation2 + $0x8] sm:$0xff] %vm136, %v2020
    // Predicated region
    $region78: #{tpu_custom_call.1} parent=1 // pred_check
      _
    $region79: #{tpu_custom_call.1} parent=1 // pred_check_branch
      %2024 = sbr.rel (0) target = $region81
    $region80: #{tpu_custom_call.1} parent=1 // pred_region
      %2026 = vsyncadd [#allocation3], 0
      %s2027 = sshll.u32 [#allocation2], 4
      %s2028 = int_to_ptr.vmem [resolvable:$true] %s2027
      %s2029 = sshll.u32 %s19, 4
      %s2030 = int_to_ptr.hbm [resolvable:$true] %s2029
      %2035 = dma.vmem_to_hbm [thread:$0]  %s2028, 256, %s2030, [#allocation3], 128, 128, 8
    $region81: #{tpu_custom_call.1} parent=1 // pred_fallthru
      _
    // Predicated region
    $region82: #{tpu_custom_call.1} parent=1 // pred_check
      _
    $region83: #{tpu_custom_call.1} parent=1 // pred_check_branch
      %2037 = sbr.rel (0) target = $region85
    $region84: #{tpu_custom_call.1} parent=1 // pred_region
      %2039 = dma.done [#allocation3], 256
    $region85: #{tpu_custom_call.1} parent=1 // pred_fallthru
      _
    %2040 = vsyncpa [#allocation3], 1

</llo_original>
